<compile_context>
chip_gen: v6e
topology: v6e:2x2x1
jax: 0.10.0
libtpu: 0.0.40
codegen_flags: <defaults>
</compile_context>

<pallas_src>
import jax
import jax.numpy as jnp
from jax import lax
from jax.experimental import pallas as pl
from jax.experimental.pallas import tpu as pltpu


def _round_up(n, m):
    return ((n + m - 1) // m) * m


def ts_encoder_kernel(x_ref,       # (ts, Bblk, Ip)        time-major input block
                      wi_ref,      # (Ip, 3*Hp)            fused input weights [r|z|n]
                      wh_ref,      # (Hp, 3*Hp)            fused hidden weights [r|z|n]
                      bi_ref,      # (1, 3*Hp)             [b_ih_r+b_hh_r | b_ih_z+b_hh_z | b_ih_n]
                      bhn_ref,     # (1, Hp)               b_hh_n (kept separate for n gate)
                      wlin_ref,    # (ts*Hp, OCp)          fused output projection
                      blin_ref,    # (1, OCp)
                      out_ref,     # (Bblk, OCp)
                      gi_ref,      # VMEM scratch (ts*Bblk, 3*Hp)
                      hs_ref,      # VMEM scratch (Bblk, ts*Hp)
                      *, unroll):
    ts, bblk, ip = x_ref.shape
    hp = wh_ref.shape[0]

    # ---- Phase 1: input projection for all timesteps (off the serial path).
    # Collapsing (ts, Bblk) -> ts*Bblk keeps the last two dims (sublane/lane)
    # untouched, so this reshape is a relabeling, not a VMEM copy.
    x2d = x_ref[...].reshape(ts * bblk, ip)
    gi_ref[...] = (jnp.dot(x2d, wi_ref[...], preferred_element_type=jnp.float32)
                   + bi_ref[...])

    # Hoist loop-invariant loads (avoid per-iteration vld + broadcast).
    wh = wh_ref[...]
    bhn = bhn_ref[...]

    # ---- Phase 2: serial GRU recurrence; only h @ W_h sits on the critical path.
    def step(t, h):
        row = pl.multiple_of(t * bblk, bblk)
        gi_t = gi_ref[pl.ds(row, bblk), :]                          # (Bblk, 3Hp)
        gh = jnp.dot(h, wh, preferred_element_type=jnp.float32)     # (Bblk, 3Hp)
        r = jax.nn.sigmoid(gi_t[:, 0:hp] + gh[:, 0:hp])
        z = jax.nn.sigmoid(gi_t[:, hp:2 * hp] + gh[:, hp:2 * hp])
        n = jnp.tanh(gi_t[:, 2 * hp:3 * hp] + r * (gh[:, 2 * hp:3 * hp] + bhn))
        h_new = (1.0 - z) * n + z * h                                # (Bblk, Hp)
        col = pl.multiple_of(t * hp, hp)
        hs_ref[:, pl.ds(col, hp)] = h_new                            # flattened (batch, ts*Hp) layout
        return h_new

    h0 = jnp.zeros((bblk, hp), jnp.float32)
    lax.fori_loop(0, ts, step, h0, unroll=unroll)

    # ---- Phase 3: one large output projection, K = ts*Hp.
    out_ref[...] = (jnp.dot(hs_ref[...], wlin_ref[...],
                            preferred_element_type=jnp.float32)
                    + blin_ref[...])


def pack_params(params, *, indim, outdim, finaldim, timestep, returnvar=True):
    """One-time weight rearrangement + lane-dense zero padding (cache across calls)."""
    H = outdim
    out_cols = 2 * finaldim if returnvar else finaldim
    Ip = _round_up(indim, 128)
    Hp = _round_up(H, 128)
    OCp = _round_up(out_cols, 128)

    w_ih, w_hh = params["w_ih"], params["w_hh"]
    b_ih, b_hh = params["b_ih"], params["b_hh"]
    w_lin, b_lin = params["w_lin"], params["b_lin"]

    def pad2(a, r, c):
        return jnp.pad(a, ((0, r - a.shape[0]), (0, c - a.shape[1])))

    def pad1(v, n):
        return jnp.pad(v, (0, n - v.shape[0]))

    # PyTorch GRU weights: (3H, in) with gate order r,z,n -> transpose per gate.
    wir, wiz, win = w_ih[0:H].T, w_ih[H:2 * H].T, w_ih[2 * H:3 * H].T
    whr, whz, whn = w_hh[0:H].T, w_hh[H:2 * H].T, w_hh[2 * H:3 * H].T
    wi = jnp.concatenate([pad2(wir, Ip, Hp), pad2(wiz, Ip, Hp), pad2(win, Ip, Hp)],
                         axis=1).astype(jnp.float32)
    wh = jnp.concatenate([pad2(whr, Hp, Hp), pad2(whz, Hp, Hp), pad2(whn, Hp, Hp)],
                         axis=1).astype(jnp.float32)

    # r/z biases (ih+hh combined) and ih-side n bias are baked into gi; hh-side
    # n bias stays separate (multiplied by r inside the cell).
    bi = jnp.concatenate([pad1(b_ih[0:H] + b_hh[0:H], Hp),
                          pad1(b_ih[H:2 * H] + b_hh[H:2 * H], Hp),
                          pad1(b_ih[2 * H:3 * H], Hp)]).reshape(1, 3 * Hp).astype(jnp.float32)
    bhn = pad1(b_hh[2 * H:3 * H], Hp).reshape(1, Hp).astype(jnp.float32)

    # Linear weight (out_cols, ts*H) -> (ts, H, out_cols) matching the
    # flatten(batch, ts, H) ordering, then pad H/out_cols and flatten the
    # contraction axis to match the (batch, ts*Hp) hidden-state scratch.
    wlin3 = w_lin.reshape(out_cols, timestep, H).transpose(1, 2, 0)   # (ts, H, OC)
    wlin3 = jnp.pad(wlin3, ((0, 0), (0, Hp - H), (0, OCp - out_cols)))
    wlin = wlin3.reshape(timestep * Hp, OCp).astype(jnp.float32)
    blin = pad1(b_lin, OCp).reshape(1, OCp).astype(jnp.float32)

    return {
        "wi": wi, "wh": wh, "bi": bi, "bhn": bhn, "wlin": wlin, "blin": blin,
        "dims": dict(indim=int(indim), H=int(H), out_cols=int(out_cols),
                     Ip=int(Ip), Hp=int(Hp), OCp=int(OCp),
                     ts=int(timestep), finaldim=int(finaldim),
                     returnvar=bool(returnvar)),
    }


def _pick_batch_block(batch, ts, Ip, Hp, OCp, vmem_budget_bytes=24 << 20):
    """Largest batch block (multiple of 8, <=256) that fits the VMEM budget."""
    # Resident weights (single-buffered, constant index_map) + bias rows.
    weight_bytes = 4 * (Ip * 3 * Hp + Hp * 3 * Hp + ts * Hp * OCp + 4 * Hp + OCp)

    def per_block_bytes(bblk):
        x_blk = 4 * ts * bblk * Ip * 2          # input block, double-buffered
        out_blk = 4 * bblk * OCp * 2            # output block, double-buffered
        gi = 4 * ts * bblk * 3 * Hp             # scratch
        hs = 4 * bblk * ts * Hp                 # scratch
        return x_blk + out_blk + gi + hs

    bblk = 256 if batch > 256 else _round_up(max(batch, 1), 8)
    while bblk > 8 and weight_bytes + per_block_bytes(bblk) > vmem_budget_bytes:
        bblk //= 2
    return max(8, _round_up(bblk, 8))


def ts_encoder_forward(x, packed):
    """x: (batch, ts, indim) (or anything reshapable to it), float32."""
    d = packed["dims"]
    ts, indim = d["ts"], d["indim"]
    Ip, Hp, OCp = d["Ip"], d["Hp"], d["OCp"]
    batch = x.shape[0]

    # Batch blocking: multiple of 8 sublanes, VMEM-budget aware, capped at 256
    # so large batches get a >1 "parallel" grid (megacore) and bounded VMEM.
    Bblk = _pick_batch_block(batch, ts, Ip, Hp, OCp)
    Bp = _round_up(batch, Bblk)

    # Bound the time-loop unroll for long sequences (compile time / icache).
    unroll = True if ts <= 32 else 8

    # Per-call glue: time-major layout + zero padding to lane-dense shapes.
    x3 = x.reshape(batch, ts, indim).transpose(1, 0, 2).astype(jnp.float32)
    x3 = jnp.pad(x3, ((0, 0), (0, Bp - batch), (0, Ip - indim)))      # (ts, Bp, Ip)

    grid = (Bp // Bblk,)
    in_specs = [
        pl.BlockSpec((ts, Bblk, Ip), lambda b: (0, b, 0)),     # x: batch-blocked
        pl.BlockSpec((Ip, 3 * Hp), lambda b: (0, 0)),          # weights stay resident
        pl.BlockSpec((Hp, 3 * Hp), lambda b: (0, 0)),
        pl.BlockSpec((1, 3 * Hp), lambda b: (0, 0)),
        pl.BlockSpec((1, Hp), lambda b: (0, 0)),
        pl.BlockSpec((ts * Hp, OCp), lambda b: (0, 0)),
        pl.BlockSpec((1, OCp), lambda b: (0, 0)),
    ]
    out_specs = pl.BlockSpec((Bblk, OCp), lambda b: (b, 0))
    scratch_shapes = [
        pltpu.VMEM((ts * Bblk, 3 * Hp), jnp.float32),   # gi for all timesteps
        pltpu.VMEM((Bblk, ts * Hp), jnp.float32),       # flattened hidden states
    ]

    import functools
    kernel = functools.partial(ts_encoder_kernel, unroll=unroll)

    out_p = pl.pallas_call(
        kernel,
        out_shape=jax.ShapeDtypeStruct((Bp, OCp), jnp.float32),
        grid=grid,
        in_specs=in_specs,
        out_specs=out_specs,
        scratch_shapes=scratch_shapes,
        compiler_params=pltpu.CompilerParams(dimension_semantics=("parallel",)),
    )(x3, packed["wi"], packed["wh"], packed["bi"], packed["bhn"],
      packed["wlin"], packed["blin"])

    out = out_p[:batch, :d["out_cols"]]
    if d["returnvar"]:
        f = d["finaldim"]
        return out[:, :f], out[:, f:]
    return out


def ts_encoder_reference(x, params, *, indim, outdim, finaldim, timestep,
                         returnvar=True):
    """Pure-JAX reference (mirrors the PyTorch forward)."""
    batch = x.shape[0]
    xt = x.reshape(batch, timestep, indim).transpose(1, 0, 2)
    w_ih, w_hh, b_ih, b_hh = (params["w_ih"], params["w_hh"],
                              params["b_ih"], params["b_hh"])
    H = outdim

    def cell(h, x_t):
        gi = x_t @ w_ih.T + b_ih
        gh = h @ w_hh.T + b_hh
        r = jax.nn.sigmoid(gi[:, :H] + gh[:, :H])
        z = jax.nn.sigmoid(gi[:, H:2 * H] + gh[:, H:2 * H])
        n = jnp.tanh(gi[:, 2 * H:] + r * gh[:, 2 * H:])
        h_new = (1.0 - z) * n + z * h
        return h_new, h_new

    h0 = jnp.zeros((batch, H), jnp.float32)
    _, outs = lax.scan(cell, h0, xt)                     # (ts, batch, H)
    flat = outs.transpose(1, 0, 2).reshape(batch, timestep * H)
    out = flat @ params["w_lin"].T + params["b_lin"]
    if returnvar:
        return out[:, :finaldim], out[:, finaldim:]
    return out


def make_params(key, indim, outdim, finaldim, timestep, returnvar=True):
    H = outdim
    out_cols = 2 * finaldim if returnvar else finaldim
    ks = jax.random.split(key, 6)
    s_gru = 1.0 / jnp.sqrt(H)
    s_lin = 1.0 / jnp.sqrt(H * timestep)
    return {
        "w_ih": jax.random.uniform(ks[0], (3 * H, indim), jnp.float32, -s_gru, s_gru),
        "w_hh": jax.random.uniform(ks[1], (3 * H, H), jnp.float32, -s_gru, s_gru),
        "b_ih": jax.random.uniform(ks[2], (3 * H,), jnp.float32, -s_gru, s_gru),
        "b_hh": jax.random.uniform(ks[3], (3 * H,), jnp.float32, -s_gru, s_gru),
        "w_lin": jax.random.uniform(ks[4], (out_cols, H * timestep), jnp.float32, -s_lin, s_lin),
        "b_lin": jax.random.uniform(ks[5], (out_cols,), jnp.float32, -s_lin, s_lin),
    }


if __name__ == "__main__":
    indim, outdim, finaldim, timestep = 4, 8, 16, 8
    batch = 2

    key = jax.random.PRNGKey(0)
    k_x, k_p = jax.random.split(key)
    x = jax.random.normal(k_x, (batch, timestep, indim), jnp.float32)
    params = make_params(k_p, indim, outdim, finaldim, timestep, returnvar=True)

    # Weight rearrangement/padding done once (cache across forward calls).
    packed = pack_params(params, indim=indim, outdim=outdim, finaldim=finaldim,
                         timestep=timestep, returnvar=True)

    mu, var = ts_encoder_forward(x, packed)
    jax.block_until_ready((mu, var))

    mu_ref, var_ref = ts_encoder_reference(x, params, indim=indim, outdim=outdim,
                                           finaldim=finaldim, timestep=timestep,
                                           returnvar=True)
    assert mu.shape == (batch, finaldim) and var.shape == (batch, finaldim)
    assert jnp.allclose(mu, mu_ref, atol=1e-5, rtol=1e-5)
    assert jnp.allclose(var, var_ref, atol=1e-5, rtol=1e-5)
    print("KERNEL_OK")
</pallas_src>

<mosaic_0001>
module attributes {stable_mosaic.version = 11 : i64} {
  func.func @ts_encoder_kernel(%arg0: i32, %arg1: memref<8x8x128xf32, #tpu.memory_space<vmem>>, %arg2: memref<128x384xf32, #tpu.memory_space<vmem>>, %arg3: memref<128x384xf32, #tpu.memory_space<vmem>>, %arg4: memref<1x384xf32, #tpu.memory_space<vmem>>, %arg5: memref<1x128xf32, #tpu.memory_space<vmem>>, %arg6: memref<1024x128xf32, #tpu.memory_space<vmem>>, %arg7: memref<1x128xf32, #tpu.memory_space<vmem>>, %arg8: memref<8x128xf32, #tpu.memory_space<vmem>>, %arg9: memref<64x384xf32, #tpu.memory_space<vmem>>, %arg10: memref<8x1024xf32, #tpu.memory_space<vmem>>) attributes {dimension_semantics = [#tpu.dimension_semantics<parallel>], iteration_bounds = array<i64: 1>, scalar_prefetch = 0 : i64, scratch_operands = 2 : i64, tpu.core_type = #tpu.core_type<tc>, window_params = [{transform_indices = @transform_0, window_bounds = array<i64: 8, 8, 128>}, {pipeline_mode = #tpu.pipeline_mode<synchronous>, transform_indices = @transform_1, window_bounds = array<i64: 128, 384>}, {pipeline_mode = #tpu.pipeline_mode<synchronous>, transform_indices = @transform_2, window_bounds = array<i64: 128, 384>}, {pipeline_mode = #tpu.pipeline_mode<synchronous>, transform_indices = @transform_3, window_bounds = array<i64: 1, 384>}, {pipeline_mode = #tpu.pipeline_mode<synchronous>, transform_indices = @transform_4, window_bounds = array<i64: 1, 128>}, {pipeline_mode = #tpu.pipeline_mode<synchronous>, transform_indices = @transform_5, window_bounds = array<i64: 1024, 128>}, {pipeline_mode = #tpu.pipeline_mode<synchronous>, transform_indices = @transform_6, window_bounds = array<i64: 1, 128>}, {transform_indices = @transform_7, window_bounds = array<i64: 8, 128>}]} {
    %c0 = arith.constant 0 : index
    %c0_0 = arith.constant 0 : index
    %c0_1 = arith.constant 0 : index
    %0 = vector.load %arg1[%c0, %c0_0, %c0_1] : memref<8x8x128xf32, #tpu.memory_space<vmem>>, vector<8x8x128xf32>
    %1 = vector.shape_cast %0 : vector<8x8x128xf32> to vector<64x128xf32>
    %c0_2 = arith.constant 0 : index
    %c0_3 = arith.constant 0 : index
    %2 = vector.load %arg2[%c0_2, %c0_3] : memref<128x384xf32, #tpu.memory_space<vmem>>, vector<128x384xf32>
    %cst = arith.constant dense<0.000000e+00> : vector<64x384xf32>
    %3 = tpu.matmul %1, %2, %cst {dimension_numbers = #tpu.dot_dimension_numbers<[1], [0], [0], [1], [0, 0, 1, 1], [], []>} : vector<64x128xf32>, vector<128x384xf32>, vector<64x384xf32> -> vector<64x384xf32>
    %c0_4 = arith.constant 0 : index
    %c0_5 = arith.constant 0 : index
    %4 = vector.load %arg4[%c0_4, %c0_5] : memref<1x384xf32, #tpu.memory_space<vmem>>, vector<1x384xf32>
    %5 = vector.broadcast %4 : vector<1x384xf32> to vector<64x384xf32>
    %6 = arith.addf %3, %5 : vector<64x384xf32>
    %c0_6 = arith.constant 0 : index
    %c0_7 = arith.constant 0 : index
    %7 = vector.load %arg9[%c0_6, %c0_7] : memref<64x384xf32, #tpu.memory_space<vmem>>, vector<64x384xf32>
    tpu.vector_store %arg9[%c0_6, %c0_7], %6 {strides = array<i32>} : memref<64x384xf32, #tpu.memory_space<vmem>>, vector<64x384xf32>,
    %c0_8 = arith.constant 0 : index
    %c0_9 = arith.constant 0 : index
    %8 = vector.load %arg3[%c0_8, %c0_9] : memref<128x384xf32, #tpu.memory_space<vmem>>, vector<128x384xf32>
    %c0_10 = arith.constant 0 : index
    %c0_11 = arith.constant 0 : index
    %9 = vector.load %arg5[%c0_10, %c0_11] : memref<1x128xf32, #tpu.memory_space<vmem>>, vector<1x128xf32>
    %cst_12 = arith.constant 0.000000e+00 : f32
    %10 = vector.broadcast %cst_12 : f32 to vector<8x128xf32>
    %c0_i32 = arith.constant 0 : i32
    %c8_i32 = arith.constant 8 : i32
    %11 = arith.muli %c0_i32, %c8_i32 : i32
    %12 = tpu.assume_multiple %11, 8 : i32
    %13 = arith.index_cast %12 : i32 to index
    %c0_13 = arith.constant 0 : index
    %14 = vector.load %arg9[%13, %c0_13] : memref<64x384xf32, #tpu.memory_space<vmem>>, vector<8x384xf32>
    %cst_14 = arith.constant dense<0.000000e+00> : vector<8x384xf32>
    %15 = tpu.matmul %10, %8, %cst_14 {dimension_numbers = #tpu.dot_dimension_numbers<[1], [0], [0], [1], [0, 0, 1, 1], [], []>} : vector<8x128xf32>, vector<128x384xf32>, vector<8x384xf32> -> vector<8x384xf32>
    %16 = vector.extract_strided_slice %14 {offsets = [0, 0], sizes = [8, 128], strides = [1, 1]} : vector<8x384xf32> to vector<8x128xf32>
    %17 = vector.extract_strided_slice %15 {offsets = [0, 0], sizes = [8, 128], strides = [1, 1]} : vector<8x384xf32> to vector<8x128xf32>
    %18 = arith.addf %16, %17 : vector<8x128xf32>
    %19 = arith.negf %18 : vector<8x128xf32>
    %20 = math.exp %19 : vector<8x128xf32>
    %cst_15 = arith.constant 1.000000e+00 : f32
    %21 = vector.broadcast %cst_15 : f32 to vector<8x128xf32>
    %22 = arith.addf %21, %20 : vector<8x128xf32>
    %23 = arith.divf %21, %22 : vector<8x128xf32>
    %24 = vector.extract_strided_slice %14 {offsets = [0, 128], sizes = [8, 128], strides = [1, 1]} : vector<8x384xf32> to vector<8x128xf32>
    %25 = vector.extract_strided_slice %15 {offsets = [0, 128], sizes = [8, 128], strides = [1, 1]} : vector<8x384xf32> to vector<8x128xf32>
    %26 = arith.addf %24, %25 : vector<8x128xf32>
    %27 = arith.negf %26 : vector<8x128xf32>
    %28 = math.exp %27 : vector<8x128xf32>
    %cst_16 = arith.constant 1.000000e+00 : f32
    %29 = vector.broadcast %cst_16 : f32 to vector<8x128xf32>
    %30 = arith.addf %29, %28 : vector<8x128xf32>
    %31 = arith.divf %29, %30 : vector<8x128xf32>
    %32 = vector.extract_strided_slice %14 {offsets = [0, 256], sizes = [8, 128], strides = [1, 1]} : vector<8x384xf32> to vector<8x128xf32>
    %33 = vector.extract_strided_slice %15 {offsets = [0, 256], sizes = [8, 128], strides = [1, 1]} : vector<8x384xf32> to vector<8x128xf32>
    %34 = vector.broadcast %9 : vector<1x128xf32> to vector<8x128xf32>
    %35 = arith.addf %33, %34 : vector<8x128xf32>
    %36 = arith.mulf %23, %35 : vector<8x128xf32>
    %37 = arith.addf %32, %36 : vector<8x128xf32>
    %38 = math.tanh %37 : vector<8x128xf32>
    %cst_17 = arith.constant 1.000000e+00 : f32
    %39 = vector.broadcast %cst_17 : f32 to vector<8x128xf32>
    %40 = arith.subf %39, %31 : vector<8x128xf32>
    %41 = arith.mulf %40, %38 : vector<8x128xf32>
    %42 = arith.mulf %31, %10 : vector<8x128xf32>
    %43 = arith.addf %41, %42 : vector<8x128xf32>
    %c128_i32 = arith.constant 128 : i32
    %44 = arith.muli %c0_i32, %c128_i32 : i32
    %45 = tpu.assume_multiple %44, 128 : i32
    %c0_18 = arith.constant 0 : index
    %46 = arith.index_cast %45 : i32 to index
    %47 = vector.load %arg10[%c0_18, %46] : memref<8x1024xf32, #tpu.memory_space<vmem>>, vector<8x128xf32>
    tpu.vector_store %arg10[%c0_18, %46], %43 {strides = array<i32>} : memref<8x1024xf32, #tpu.memory_space<vmem>>, vector<8x128xf32>,
    %c1_i32 = arith.constant 1 : i32
    %c8_i32_19 = arith.constant 8 : i32
    %48 = arith.muli %c1_i32, %c8_i32_19 : i32
    %49 = tpu.assume_multiple %48, 8 : i32
    %50 = arith.index_cast %49 : i32 to index
    %c0_20 = arith.constant 0 : index
    %51 = vector.load %arg9[%50, %c0_20] : memref<64x384xf32, #tpu.memory_space<vmem>>, vector<8x384xf32>
    %cst_21 = arith.constant dense<0.000000e+00> : vector<8x384xf32>
    %52 = tpu.matmul %43, %8, %cst_21 {dimension_numbers = #tpu.dot_dimension_numbers<[1], [0], [0], [1], [0, 0, 1, 1], [], []>} : vector<8x128xf32>, vector<128x384xf32>, vector<8x384xf32> -> vector<8x384xf32>
    %53 = vector.extract_strided_slice %51 {offsets = [0, 0], sizes = [8, 128], strides = [1, 1]} : vector<8x384xf32> to vector<8x128xf32>
    %54 = vector.extract_strided_slice %52 {offsets = [0, 0], sizes = [8, 128], strides = [1, 1]} : vector<8x384xf32> to vector<8x128xf32>
    %55 = arith.addf %53, %54 : vector<8x128xf32>
    %56 = arith.negf %55 : vector<8x128xf32>
    %57 = math.exp %56 : vector<8x128xf32>
    %cst_22 = arith.constant 1.000000e+00 : f32
    %58 = vector.broadcast %cst_22 : f32 to vector<8x128xf32>
    %59 = arith.addf %58, %57 : vector<8x128xf32>
    %60 = arith.divf %58, %59 : vector<8x128xf32>
    %61 = vector.extract_strided_slice %51 {offsets = [0, 128], sizes = [8, 128], strides = [1, 1]} : vector<8x384xf32> to vector<8x128xf32>
    %62 = vector.extract_strided_slice %52 {offsets = [0, 128], sizes = [8, 128], strides = [1, 1]} : vector<8x384xf32> to vector<8x128xf32>
    %63 = arith.addf %61, %62 : vector<8x128xf32>
    %64 = arith.negf %63 : vector<8x128xf32>
    %65 = math.exp %64 : vector<8x128xf32>
    %cst_23 = arith.constant 1.000000e+00 : f32
    %66 = vector.broadcast %cst_23 : f32 to vector<8x128xf32>
    %67 = arith.addf %66, %65 : vector<8x128xf32>
    %68 = arith.divf %66, %67 : vector<8x128xf32>
    %69 = vector.extract_strided_slice %51 {offsets = [0, 256], sizes = [8, 128], strides = [1, 1]} : vector<8x384xf32> to vector<8x128xf32>
    %70 = vector.extract_strided_slice %52 {offsets = [0, 256], sizes = [8, 128], strides = [1, 1]} : vector<8x384xf32> to vector<8x128xf32>
    %71 = vector.broadcast %9 : vector<1x128xf32> to vector<8x128xf32>
    %72 = arith.addf %70, %71 : vector<8x128xf32>
    %73 = arith.mulf %60, %72 : vector<8x128xf32>
    %74 = arith.addf %69, %73 : vector<8x128xf32>
    %75 = math.tanh %74 : vector<8x128xf32>
    %cst_24 = arith.constant 1.000000e+00 : f32
    %76 = vector.broadcast %cst_24 : f32 to vector<8x128xf32>
    %77 = arith.subf %76, %68 : vector<8x128xf32>
    %78 = arith.mulf %77, %75 : vector<8x128xf32>
    %79 = arith.mulf %68, %43 : vector<8x128xf32>
    %80 = arith.addf %78, %79 : vector<8x128xf32>
    %c128_i32_25 = arith.constant 128 : i32
    %81 = arith.muli %c1_i32, %c128_i32_25 : i32
    %82 = tpu.assume_multiple %81, 128 : i32
    %c0_26 = arith.constant 0 : index
    %83 = arith.index_cast %82 : i32 to index
    %84 = vector.load %arg10[%c0_26, %83] : memref<8x1024xf32, #tpu.memory_space<vmem>>, vector<8x128xf32>
    tpu.vector_store %arg10[%c0_26, %83], %80 {strides = array<i32>} : memref<8x1024xf32, #tpu.memory_space<vmem>>, vector<8x128xf32>,
    %c2_i32 = arith.constant 2 : i32
    %c8_i32_27 = arith.constant 8 : i32
    %85 = arith.muli %c2_i32, %c8_i32_27 : i32
    %86 = tpu.assume_multiple %85, 8 : i32
    %87 = arith.index_cast %86 : i32 to index
    %c0_28 = arith.constant 0 : index
    %88 = vector.load %arg9[%87, %c0_28] : memref<64x384xf32, #tpu.memory_space<vmem>>, vector<8x384xf32>
    %cst_29 = arith.constant dense<0.000000e+00> : vector<8x384xf32>
    %89 = tpu.matmul %80, %8, %cst_29 {dimension_numbers = #tpu.dot_dimension_numbers<[1], [0], [0], [1], [0, 0, 1, 1], [], []>} : vector<8x128xf32>, vector<128x384xf32>, vector<8x384xf32> -> vector<8x384xf32>
    %90 = vector.extract_strided_slice %88 {offsets = [0, 0], sizes = [8, 128], strides = [1, 1]} : vector<8x384xf32> to vector<8x128xf32>
    %91 = vector.extract_strided_slice %89 {offsets = [0, 0], sizes = [8, 128], strides = [1, 1]} : vector<8x384xf32> to vector<8x128xf32>
    %92 = arith.addf %90, %91 : vector<8x128xf32>
    %93 = arith.negf %92 : vector<8x128xf32>
    %94 = math.exp %93 : vector<8x128xf32>
    %cst_30 = arith.constant 1.000000e+00 : f32
    %95 = vector.broadcast %cst_30 : f32 to vector<8x128xf32>
    %96 = arith.addf %95, %94 : vector<8x128xf32>
    %97 = arith.divf %95, %96 : vector<8x128xf32>
    %98 = vector.extract_strided_slice %88 {offsets = [0, 128], sizes = [8, 128], strides = [1, 1]} : vector<8x384xf32> to vector<8x128xf32>
    %99 = vector.extract_strided_slice %89 {offsets = [0, 128], sizes = [8, 128], strides = [1, 1]} : vector<8x384xf32> to vector<8x128xf32>
    %100 = arith.addf %98, %99 : vector<8x128xf32>
    %101 = arith.negf %100 : vector<8x128xf32>
    %102 = math.exp %101 : vector<8x128xf32>
    %cst_31 = arith.constant 1.000000e+00 : f32
    %103 = vector.broadcast %cst_31 : f32 to vector<8x128xf32>
    %104 = arith.addf %103, %102 : vector<8x128xf32>
    %105 = arith.divf %103, %104 : vector<8x128xf32>
    %106 = vector.extract_strided_slice %88 {offsets = [0, 256], sizes = [8, 128], strides = [1, 1]} : vector<8x384xf32> to vector<8x128xf32>
    %107 = vector.extract_strided_slice %89 {offsets = [0, 256], sizes = [8, 128], strides = [1, 1]} : vector<8x384xf32> to vector<8x128xf32>
    %108 = vector.broadcast %9 : vector<1x128xf32> to vector<8x128xf32>
    %109 = arith.addf %107, %108 : vector<8x128xf32>
    %110 = arith.mulf %97, %109 : vector<8x128xf32>
    %111 = arith.addf %106, %110 : vector<8x128xf32>
    %112 = math.tanh %111 : vector<8x128xf32>
    %cst_32 = arith.constant 1.000000e+00 : f32
    %113 = vector.broadcast %cst_32 : f32 to vector<8x128xf32>
    %114 = arith.subf %113, %105 : vector<8x128xf32>
    %115 = arith.mulf %114, %112 : vector<8x128xf32>
    %116 = arith.mulf %105, %80 : vector<8x128xf32>
    %117 = arith.addf %115, %116 : vector<8x128xf32>
    %c128_i32_33 = arith.constant 128 : i32
    %118 = arith.muli %c2_i32, %c128_i32_33 : i32
    %119 = tpu.assume_multiple %118, 128 : i32
    %c0_34 = arith.constant 0 : index
    %120 = arith.index_cast %119 : i32 to index
    %121 = vector.load %arg10[%c0_34, %120] : memref<8x1024xf32, #tpu.memory_space<vmem>>, vector<8x128xf32>
    tpu.vector_store %arg10[%c0_34, %120], %117 {strides = array<i32>} : memref<8x1024xf32, #tpu.memory_space<vmem>>, vector<8x128xf32>,
    %c3_i32 = arith.constant 3 : i32
    %c8_i32_35 = arith.constant 8 : i32
    %122 = arith.muli %c3_i32, %c8_i32_35 : i32
    %123 = tpu.assume_multiple %122, 8 : i32
    %124 = arith.index_cast %123 : i32 to index
    %c0_36 = arith.constant 0 : index
    %125 = vector.load %arg9[%124, %c0_36] : memref<64x384xf32, #tpu.memory_space<vmem>>, vector<8x384xf32>
    %cst_37 = arith.constant dense<0.000000e+00> : vector<8x384xf32>
    %126 = tpu.matmul %117, %8, %cst_37 {dimension_numbers = #tpu.dot_dimension_numbers<[1], [0], [0], [1], [0, 0, 1, 1], [], []>} : vector<8x128xf32>, vector<128x384xf32>, vector<8x384xf32> -> vector<8x384xf32>
    %127 = vector.extract_strided_slice %125 {offsets = [0, 0], sizes = [8, 128], strides = [1, 1]} : vector<8x384xf32> to vector<8x128xf32>
    %128 = vector.extract_strided_slice %126 {offsets = [0, 0], sizes = [8, 128], strides = [1, 1]} : vector<8x384xf32> to vector<8x128xf32>
    %129 = arith.addf %127, %128 : vector<8x128xf32>
    %130 = arith.negf %129 : vector<8x128xf32>
    %131 = math.exp %130 : vector<8x128xf32>
    %cst_38 = arith.constant 1.000000e+00 : f32
    %132 = vector.broadcast %cst_38 : f32 to vector<8x128xf32>
    %133 = arith.addf %132, %131 : vector<8x128xf32>
    %134 = arith.divf %132, %133 : vector<8x128xf32>
    %135 = vector.extract_strided_slice %125 {offsets = [0, 128], sizes = [8, 128], strides = [1, 1]} : vector<8x384xf32> to vector<8x128xf32>
    %136 = vector.extract_strided_slice %126 {offsets = [0, 128], sizes = [8, 128], strides = [1, 1]} : vector<8x384xf32> to vector<8x128xf32>
    %137 = arith.addf %135, %136 : vector<8x128xf32>
    %138 = arith.negf %137 : vector<8x128xf32>
    %139 = math.exp %138 : vector<8x128xf32>
    %cst_39 = arith.constant 1.000000e+00 : f32
    %140 = vector.broadcast %cst_39 : f32 to vector<8x128xf32>
    %141 = arith.addf %140, %139 : vector<8x128xf32>
    %142 = arith.divf %140, %141 : vector<8x128xf32>
    %143 = vector.extract_strided_slice %125 {offsets = [0, 256], sizes = [8, 128], strides = [1, 1]} : vector<8x384xf32> to vector<8x128xf32>
    %144 = vector.extract_strided_slice %126 {offsets = [0, 256], sizes = [8, 128], strides = [1, 1]} : vector<8x384xf32> to vector<8x128xf32>
    %145 = vector.broadcast %9 : vector<1x128xf32> to vector<8x128xf32>
    %146 = arith.addf %144, %145 : vector<8x128xf32>
    %147 = arith.mulf %134, %146 : vector<8x128xf32>
    %148 = arith.addf %143, %147 : vector<8x128xf32>
    %149 = math.tanh %148 : vector<8x128xf32>
    %cst_40 = arith.constant 1.000000e+00 : f32
    %150 = vector.broadcast %cst_40 : f32 to vector<8x128xf32>
    %151 = arith.subf %150, %142 : vector<8x128xf32>
    %152 = arith.mulf %151, %149 : vector<8x128xf32>
    %153 = arith.mulf %142, %117 : vector<8x128xf32>
    %154 = arith.addf %152, %153 : vector<8x128xf32>
    %c128_i32_41 = arith.constant 128 : i32
    %155 = arith.muli %c3_i32, %c128_i32_41 : i32
    %156 = tpu.assume_multiple %155, 128 : i32
    %c0_42 = arith.constant 0 : index
    %157 = arith.index_cast %156 : i32 to index
    %158 = vector.load %arg10[%c0_42, %157] : memref<8x1024xf32, #tpu.memory_space<vmem>>, vector<8x128xf32>
    tpu.vector_store %arg10[%c0_42, %157], %154 {strides = array<i32>} : memref<8x1024xf32, #tpu.memory_space<vmem>>, vector<8x128xf32>,
    %c4_i32 = arith.constant 4 : i32
    %c8_i32_43 = arith.constant 8 : i32
    %159 = arith.muli %c4_i32, %c8_i32_43 : i32
    %160 = tpu.assume_multiple %159, 8 : i32
    %161 = arith.index_cast %160 : i32 to index
    %c0_44 = arith.constant 0 : index
    %162 = vector.load %arg9[%161, %c0_44] : memref<64x384xf32, #tpu.memory_space<vmem>>, vector<8x384xf32>
    %cst_45 = arith.constant dense<0.000000e+00> : vector<8x384xf32>
    %163 = tpu.matmul %154, %8, %cst_45 {dimension_numbers = #tpu.dot_dimension_numbers<[1], [0], [0], [1], [0, 0, 1, 1], [], []>} : vector<8x128xf32>, vector<128x384xf32>, vector<8x384xf32> -> vector<8x384xf32>
    %164 = vector.extract_strided_slice %162 {offsets = [0, 0], sizes = [8, 128], strides = [1, 1]} : vector<8x384xf32> to vector<8x128xf32>
    %165 = vector.extract_strided_slice %163 {offsets = [0, 0], sizes = [8, 128], strides = [1, 1]} : vector<8x384xf32> to vector<8x128xf32>
    %166 = arith.addf %164, %165 : vector<8x128xf32>
    %167 = arith.negf %166 : vector<8x128xf32>
    %168 = math.exp %167 : vector<8x128xf32>
    %cst_46 = arith.constant 1.000000e+00 : f32
    %169 = vector.broadcast %cst_46 : f32 to vector<8x128xf32>
    %170 = arith.addf %169, %168 : vector<8x128xf32>
    %171 = arith.divf %169, %170 : vector<8x128xf32>
    %172 = vector.extract_strided_slice %162 {offsets = [0, 128], sizes = [8, 128], strides = [1, 1]} : vector<8x384xf32> to vector<8x128xf32>
    %173 = vector.extract_strided_slice %163 {offsets = [0, 128], sizes = [8, 128], strides = [1, 1]} : vector<8x384xf32> to vector<8x128xf32>
    %174 = arith.addf %172, %173 : vector<8x128xf32>
    %175 = arith.negf %174 : vector<8x128xf32>
    %176 = math.exp %175 : vector<8x128xf32>
    %cst_47 = arith.constant 1.000000e+00 : f32
    %177 = vector.broadcast %cst_47 : f32 to vector<8x128xf32>
    %178 = arith.addf %177, %176 : vector<8x128xf32>
    %179 = arith.divf %177, %178 : vector<8x128xf32>
    %180 = vector.extract_strided_slice %162 {offsets = [0, 256], sizes = [8, 128], strides = [1, 1]} : vector<8x384xf32> to vector<8x128xf32>
    %181 = vector.extract_strided_slice %163 {offsets = [0, 256], sizes = [8, 128], strides = [1, 1]} : vector<8x384xf32> to vector<8x128xf32>
    %182 = vector.broadcast %9 : vector<1x128xf32> to vector<8x128xf32>
    %183 = arith.addf %181, %182 : vector<8x128xf32>
    %184 = arith.mulf %171, %183 : vector<8x128xf32>
    %185 = arith.addf %180, %184 : vector<8x128xf32>
    %186 = math.tanh %185 : vector<8x128xf32>
    %cst_48 = arith.constant 1.000000e+00 : f32
    %187 = vector.broadcast %cst_48 : f32 to vector<8x128xf32>
    %188 = arith.subf %187, %179 : vector<8x128xf32>
    %189 = arith.mulf %188, %186 : vector<8x128xf32>
    %190 = arith.mulf %179, %154 : vector<8x128xf32>
    %191 = arith.addf %189, %190 : vector<8x128xf32>
    %c128_i32_49 = arith.constant 128 : i32
    %192 = arith.muli %c4_i32, %c128_i32_49 : i32
    %193 = tpu.assume_multiple %192, 128 : i32
    %c0_50 = arith.constant 0 : index
    %194 = arith.index_cast %193 : i32 to index
    %195 = vector.load %arg10[%c0_50, %194] : memref<8x1024xf32, #tpu.memory_space<vmem>>, vector<8x128xf32>
    tpu.vector_store %arg10[%c0_50, %194], %191 {strides = array<i32>} : memref<8x1024xf32, #tpu.memory_space<vmem>>, vector<8x128xf32>,
    %c5_i32 = arith.constant 5 : i32
    %c8_i32_51 = arith.constant 8 : i32
    %196 = arith.muli %c5_i32, %c8_i32_51 : i32
    %197 = tpu.assume_multiple %196, 8 : i32
    %198 = arith.index_cast %197 : i32 to index
    %c0_52 = arith.constant 0 : index
    %199 = vector.load %arg9[%198, %c0_52] : memref<64x384xf32, #tpu.memory_space<vmem>>, vector<8x384xf32>
    %cst_53 = arith.constant dense<0.000000e+00> : vector<8x384xf32>
    %200 = tpu.matmul %191, %8, %cst_53 {dimension_numbers = #tpu.dot_dimension_numbers<[1], [0], [0], [1], [0, 0, 1, 1], [], []>} : vector<8x128xf32>, vector<128x384xf32>, vector<8x384xf32> -> vector<8x384xf32>
    %201 = vector.extract_strided_slice %199 {offsets = [0, 0], sizes = [8, 128], strides = [1, 1]} : vector<8x384xf32> to vector<8x128xf32>
    %202 = vector.extract_strided_slice %200 {offsets = [0, 0], sizes = [8, 128], strides = [1, 1]} : vector<8x384xf32> to vector<8x128xf32>
    %203 = arith.addf %201, %202 : vector<8x128xf32>
    %204 = arith.negf %203 : vector<8x128xf32>
    %205 = math.exp %204 : vector<8x128xf32>
    %cst_54 = arith.constant 1.000000e+00 : f32
    %206 = vector.broadcast %cst_54 : f32 to vector<8x128xf32>
    %207 = arith.addf %206, %205 : vector<8x128xf32>
    %208 = arith.divf %206, %207 : vector<8x128xf32>
    %209 = vector.extract_strided_slice %199 {offsets = [0, 128], sizes = [8, 128], strides = [1, 1]} : vector<8x384xf32> to vector<8x128xf32>
    %210 = vector.extract_strided_slice %200 {offsets = [0, 128], sizes = [8, 128], strides = [1, 1]} : vector<8x384xf32> to vector<8x128xf32>
    %211 = arith.addf %209, %210 : vector<8x128xf32>
    %212 = arith.negf %211 : vector<8x128xf32>
    %213 = math.exp %212 : vector<8x128xf32>
    %cst_55 = arith.constant 1.000000e+00 : f32
    %214 = vector.broadcast %cst_55 : f32 to vector<8x128xf32>
    %215 = arith.addf %214, %213 : vector<8x128xf32>
    %216 = arith.divf %214, %215 : vector<8x128xf32>
    %217 = vector.extract_strided_slice %199 {offsets = [0, 256], sizes = [8, 128], strides = [1, 1]} : vector<8x384xf32> to vector<8x128xf32>
    %218 = vector.extract_strided_slice %200 {offsets = [0, 256], sizes = [8, 128], strides = [1, 1]} : vector<8x384xf32> to vector<8x128xf32>
    %219 = vector.broadcast %9 : vector<1x128xf32> to vector<8x128xf32>
    %220 = arith.addf %218, %219 : vector<8x128xf32>
    %221 = arith.mulf %208, %220 : vector<8x128xf32>
    %222 = arith.addf %217, %221 : vector<8x128xf32>
    %223 = math.tanh %222 : vector<8x128xf32>
    %cst_56 = arith.constant 1.000000e+00 : f32
    %224 = vector.broadcast %cst_56 : f32 to vector<8x128xf32>
    %225 = arith.subf %224, %216 : vector<8x128xf32>
    %226 = arith.mulf %225, %223 : vector<8x128xf32>
    %227 = arith.mulf %216, %191 : vector<8x128xf32>
    %228 = arith.addf %226, %227 : vector<8x128xf32>
    %c128_i32_57 = arith.constant 128 : i32
    %229 = arith.muli %c5_i32, %c128_i32_57 : i32
    %230 = tpu.assume_multiple %229, 128 : i32
    %c0_58 = arith.constant 0 : index
    %231 = arith.index_cast %230 : i32 to index
    %232 = vector.load %arg10[%c0_58, %231] : memref<8x1024xf32, #tpu.memory_space<vmem>>, vector<8x128xf32>
    tpu.vector_store %arg10[%c0_58, %231], %228 {strides = array<i32>} : memref<8x1024xf32, #tpu.memory_space<vmem>>, vector<8x128xf32>,
    %c6_i32 = arith.constant 6 : i32
    %c8_i32_59 = arith.constant 8 : i32
    %233 = arith.muli %c6_i32, %c8_i32_59 : i32
    %234 = tpu.assume_multiple %233, 8 : i32
    %235 = arith.index_cast %234 : i32 to index
    %c0_60 = arith.constant 0 : index
    %236 = vector.load %arg9[%235, %c0_60] : memref<64x384xf32, #tpu.memory_space<vmem>>, vector<8x384xf32>
    %cst_61 = arith.constant dense<0.000000e+00> : vector<8x384xf32>
    %237 = tpu.matmul %228, %8, %cst_61 {dimension_numbers = #tpu.dot_dimension_numbers<[1], [0], [0], [1], [0, 0, 1, 1], [], []>} : vector<8x128xf32>, vector<128x384xf32>, vector<8x384xf32> -> vector<8x384xf32>
    %238 = vector.extract_strided_slice %236 {offsets = [0, 0], sizes = [8, 128], strides = [1, 1]} : vector<8x384xf32> to vector<8x128xf32>
    %239 = vector.extract_strided_slice %237 {offsets = [0, 0], sizes = [8, 128], strides = [1, 1]} : vector<8x384xf32> to vector<8x128xf32>
    %240 = arith.addf %238, %239 : vector<8x128xf32>
    %241 = arith.negf %240 : vector<8x128xf32>
    %242 = math.exp %241 : vector<8x128xf32>
    %cst_62 = arith.constant 1.000000e+00 : f32
    %243 = vector.broadcast %cst_62 : f32 to vector<8x128xf32>
    %244 = arith.addf %243, %242 : vector<8x128xf32>
    %245 = arith.divf %243, %244 : vector<8x128xf32>
    %246 = vector.extract_strided_slice %236 {offsets = [0, 128], sizes = [8, 128], strides = [1, 1]} : vector<8x384xf32> to vector<8x128xf32>
    %247 = vector.extract_strided_slice %237 {offsets = [0, 128], sizes = [8, 128], strides = [1, 1]} : vector<8x384xf32> to vector<8x128xf32>
    %248 = arith.addf %246, %247 : vector<8x128xf32>
    %249 = arith.negf %248 : vector<8x128xf32>
    %250 = math.exp %249 : vector<8x128xf32>
    %cst_63 = arith.constant 1.000000e+00 : f32
    %251 = vector.broadcast %cst_63 : f32 to vector<8x128xf32>
    %252 = arith.addf %251, %250 : vector<8x128xf32>
    %253 = arith.divf %251, %252 : vector<8x128xf32>
    %254 = vector.extract_strided_slice %236 {offsets = [0, 256], sizes = [8, 128], strides = [1, 1]} : vector<8x384xf32> to vector<8x128xf32>
    %255 = vector.extract_strided_slice %237 {offsets = [0, 256], sizes = [8, 128], strides = [1, 1]} : vector<8x384xf32> to vector<8x128xf32>
    %256 = vector.broadcast %9 : vector<1x128xf32> to vector<8x128xf32>
    %257 = arith.addf %255, %256 : vector<8x128xf32>
    %258 = arith.mulf %245, %257 : vector<8x128xf32>
    %259 = arith.addf %254, %258 : vector<8x128xf32>
    %260 = math.tanh %259 : vector<8x128xf32>
    %cst_64 = arith.constant 1.000000e+00 : f32
    %261 = vector.broadcast %cst_64 : f32 to vector<8x128xf32>
    %262 = arith.subf %261, %253 : vector<8x128xf32>
    %263 = arith.mulf %262, %260 : vector<8x128xf32>
    %264 = arith.mulf %253, %228 : vector<8x128xf32>
    %265 = arith.addf %263, %264 : vector<8x128xf32>
    %c128_i32_65 = arith.constant 128 : i32
    %266 = arith.muli %c6_i32, %c128_i32_65 : i32
    %267 = tpu.assume_multiple %266, 128 : i32
    %c0_66 = arith.constant 0 : index
    %268 = arith.index_cast %267 : i32 to index
    %269 = vector.load %arg10[%c0_66, %268] : memref<8x1024xf32, #tpu.memory_space<vmem>>, vector<8x128xf32>
    tpu.vector_store %arg10[%c0_66, %268], %265 {strides = array<i32>} : memref<8x1024xf32, #tpu.memory_space<vmem>>, vector<8x128xf32>,
    %c7_i32 = arith.constant 7 : i32
    %c8_i32_67 = arith.constant 8 : i32
    %270 = arith.muli %c7_i32, %c8_i32_67 : i32
    %271 = tpu.assume_multiple %270, 8 : i32
    %272 = arith.index_cast %271 : i32 to index
    %c0_68 = arith.constant 0 : index
    %273 = vector.load %arg9[%272, %c0_68] : memref<64x384xf32, #tpu.memory_space<vmem>>, vector<8x384xf32>
    %cst_69 = arith.constant dense<0.000000e+00> : vector<8x384xf32>
    %274 = tpu.matmul %265, %8, %cst_69 {dimension_numbers = #tpu.dot_dimension_numbers<[1], [0], [0], [1], [0, 0, 1, 1], [], []>} : vector<8x128xf32>, vector<128x384xf32>, vector<8x384xf32> -> vector<8x384xf32>
    %275 = vector.extract_strided_slice %273 {offsets = [0, 0], sizes = [8, 128], strides = [1, 1]} : vector<8x384xf32> to vector<8x128xf32>
    %276 = vector.extract_strided_slice %274 {offsets = [0, 0], sizes = [8, 128], strides = [1, 1]} : vector<8x384xf32> to vector<8x128xf32>
    %277 = arith.addf %275, %276 : vector<8x128xf32>
    %278 = arith.negf %277 : vector<8x128xf32>
    %279 = math.exp %278 : vector<8x128xf32>
    %cst_70 = arith.constant 1.000000e+00 : f32
    %280 = vector.broadcast %cst_70 : f32 to vector<8x128xf32>
    %281 = arith.addf %280, %279 : vector<8x128xf32>
    %282 = arith.divf %280, %281 : vector<8x128xf32>
    %283 = vector.extract_strided_slice %273 {offsets = [0, 128], sizes = [8, 128], strides = [1, 1]} : vector<8x384xf32> to vector<8x128xf32>
    %284 = vector.extract_strided_slice %274 {offsets = [0, 128], sizes = [8, 128], strides = [1, 1]} : vector<8x384xf32> to vector<8x128xf32>
    %285 = arith.addf %283, %284 : vector<8x128xf32>
    %286 = arith.negf %285 : vector<8x128xf32>
    %287 = math.exp %286 : vector<8x128xf32>
    %cst_71 = arith.constant 1.000000e+00 : f32
    %288 = vector.broadcast %cst_71 : f32 to vector<8x128xf32>
    %289 = arith.addf %288, %287 : vector<8x128xf32>
    %290 = arith.divf %288, %289 : vector<8x128xf32>
    %291 = vector.extract_strided_slice %273 {offsets = [0, 256], sizes = [8, 128], strides = [1, 1]} : vector<8x384xf32> to vector<8x128xf32>
    %292 = vector.extract_strided_slice %274 {offsets = [0, 256], sizes = [8, 128], strides = [1, 1]} : vector<8x384xf32> to vector<8x128xf32>
    %293 = vector.broadcast %9 : vector<1x128xf32> to vector<8x128xf32>
    %294 = arith.addf %292, %293 : vector<8x128xf32>
    %295 = arith.mulf %282, %294 : vector<8x128xf32>
    %296 = arith.addf %291, %295 : vector<8x128xf32>
    %297 = math.tanh %296 : vector<8x128xf32>
    %cst_72 = arith.constant 1.000000e+00 : f32
    %298 = vector.broadcast %cst_72 : f32 to vector<8x128xf32>
    %299 = arith.subf %298, %290 : vector<8x128xf32>
    %300 = arith.mulf %299, %297 : vector<8x128xf32>
    %301 = arith.mulf %290, %265 : vector<8x128xf32>
    %302 = arith.addf %300, %301 : vector<8x128xf32>
    %c128_i32_73 = arith.constant 128 : i32
    %303 = arith.muli %c7_i32, %c128_i32_73 : i32
    %304 = tpu.assume_multiple %303, 128 : i32
    %c0_74 = arith.constant 0 : index
    %305 = arith.index_cast %304 : i32 to index
    %306 = vector.load %arg10[%c0_74, %305] : memref<8x1024xf32, #tpu.memory_space<vmem>>, vector<8x128xf32>
    tpu.vector_store %arg10[%c0_74, %305], %302 {strides = array<i32>} : memref<8x1024xf32, #tpu.memory_space<vmem>>, vector<8x128xf32>,
    %c8_i32_75 = arith.constant 8 : i32
    %c0_76 = arith.constant 0 : index
    %c0_77 = arith.constant 0 : index
    %307 = vector.load %arg10[%c0_76, %c0_77] : memref<8x1024xf32, #tpu.memory_space<vmem>>, vector<8x1024xf32>
    %c0_78 = arith.constant 0 : index
    %c0_79 = arith.constant 0 : index
    %308 = vector.load %arg6[%c0_78, %c0_79] : memref<1024x128xf32, #tpu.memory_space<vmem>>, vector<1024x128xf32>
    %cst_80 = arith.constant dense<0.000000e+00> : vector<8x128xf32>
    %309 = tpu.matmul %307, %308, %cst_80 {dimension_numbers = #tpu.dot_dimension_numbers<[1], [0], [0], [1], [0, 0, 1, 1], [], []>} : vector<8x1024xf32>, vector<1024x128xf32>, vector<8x128xf32> -> vector<8x128xf32>
    %c0_81 = arith.constant 0 : index
    %c0_82 = arith.constant 0 : index
    %310 = vector.load %arg7[%c0_81, %c0_82] : memref<1x128xf32, #tpu.memory_space<vmem>>, vector<1x128xf32>
    %311 = vector.broadcast %310 : vector<1x128xf32> to vector<8x128xf32>
    %312 = arith.addf %309, %311 : vector<8x128xf32>
    %c0_83 = arith.constant 0 : index
    %c0_84 = arith.constant 0 : index
    %313 = vector.load %arg8[%c0_83, %c0_84] : memref<8x128xf32, #tpu.memory_space<vmem>>, vector<8x128xf32>
    tpu.vector_store %arg8[%c0_83, %c0_84], %312 {strides = array<i32>} : memref<8x128xf32, #tpu.memory_space<vmem>>, vector<8x128xf32>,
    return
  }
  func.func @transform_0(%arg0: i32) -> (i32, i32, i32) {
    %c0_i32 = arith.constant 0 : i32
    %c0_i32_0 = arith.constant 0 : i32
    %c0_i32_1 = arith.constant 0 : i32
    return %c0_i32, %arg0, %c0_i32_0 : i32, i32, i32
  }
  func.func @transform_1(%arg0: i32) -> (i32, i32) {
    %c0_i32 = arith.constant 0 : i32
    %c0_i32_0 = arith.constant 0 : i32
    %c0_i32_1 = arith.constant 0 : i32
    return %c0_i32, %c0_i32_0 : i32, i32
  }
  func.func @transform_2(%arg0: i32) -> (i32, i32) {
    %c0_i32 = arith.constant 0 : i32
    %c0_i32_0 = arith.constant 0 : i32
    %c0_i32_1 = arith.constant 0 : i32
    return %c0_i32, %c0_i32_0 : i32, i32
  }
  func.func @transform_3(%arg0: i32) -> (i32, i32) {
    %c0_i32 = arith.constant 0 : i32
    %c0_i32_0 = arith.constant 0 : i32
    %c0_i32_1 = arith.constant 0 : i32
    return %c0_i32, %c0_i32_0 : i32, i32
  }
  func.func @transform_4(%arg0: i32) -> (i32, i32) {
    %c0_i32 = arith.constant 0 : i32
    %c0_i32_0 = arith.constant 0 : i32
    %c0_i32_1 = arith.constant 0 : i32
    return %c0_i32, %c0_i32_0 : i32, i32
  }
  func.func @transform_5(%arg0: i32) -> (i32, i32) {
    %c0_i32 = arith.constant 0 : i32
    %c0_i32_0 = arith.constant 0 : i32
    %c0_i32_1 = arith.constant 0 : i32
    return %c0_i32, %c0_i32_0 : i32, i32
  }
  func.func @transform_6(%arg0: i32) -> (i32, i32) {
    %c0_i32 = arith.constant 0 : i32
    %c0_i32_0 = arith.constant 0 : i32
    %c0_i32_1 = arith.constant 0 : i32
    return %c0_i32, %c0_i32_0 : i32, i32
  }
  func.func @transform_7(%arg0: i32) -> (i32, i32) {
    %c0_i32 = arith.constant 0 : i32
    %c0_i32_0 = arith.constant 0 : i32
    return %arg0, %c0_i32 : i32, i32
  }
}

</mosaic_0001>

<llo_original>
// kernel: tpu_custom_call.1
$region0: #{tpu_custom_call.1}
  #allocation0 [shape = 'u32[]', space=smem, size = 0x4, offset = 0x4, fixed_abs, tag = 'smem constant byte address 0x4 - core index']
  #allocation1 [shape = 'u32[144,128]{1,0:T(1,128)}', space=vmem, size = 0x12000, scoped, tag = 'internal scratch']
  #allocation2 [shape = 'f32[64,384]{1,0:T(8,128)}', space=vmem, size = 0x18000, scoped, tag = 'scratch operand']
  #allocation3 [shape = 'f32[8,1024]{1,0:T(8,128)}', space=vmem, size = 0x8000, scoped, tag = 'scratch operand']
  %s0 = inlined_call_operand.hbm [shape: f32[8,8,128], index: 0, kind: input, shape index: {}]
  %s1 = inlined_call_operand.hbm [shape: f32[128,384], index: 1, kind: input, shape index: {}]
  %s2 = inlined_call_operand.hbm [shape: f32[128,384], index: 2, kind: input, shape index: {}]
  %s3 = inlined_call_operand.vmem [shape: f32[1,384], index: 3, kind: input, shape index: {}]
  %s4 = inlined_call_operand.vmem [shape: f32[1,128], index: 4, kind: input, shape index: {}]
  %s5 = inlined_call_operand.hbm [shape: f32[1024,128], index: 5, kind: input, shape index: {}]
  %s6 = inlined_call_operand.vmem [shape: f32[1,128], index: 6, kind: input, shape index: {}]
  %s7 = inlined_call_operand.hbm [shape: f32[8,128], index: 7, kind: output, shape index: {}]
  %s8 = sld [smem:[#allocation0]]
  $region54: #{tpu_custom_call.1} parent=0
    _
  %s10 = ssub.s32 1, %s8
  %s11 = scalar_select 0, %s10, %s8
  $region1: #{tpu_custom_call.1} parent=0
    #allocation4 [shape = 'u8[32768]{0}', space=vmem, size = 0x8000, scoped, tag = 'input window, operand 0, single buffered']
    #allocation5 [shape = 's32[1]{0}', space=sflag, size = 0x4, scoped, tag = 'scoped memory for tpu_custom_call.1']
    #allocation6 [shape = 's32[1]{0}', space=sflag, size = 0x4, scoped, tag = 'scoped memory for tpu_custom_call.1']
    #allocation7 [shape = 'u8[196608]{0}', space=vmem, size = 0x30000, scoped, tag = 'input window, operand 1, single buffered']
    #allocation8 [shape = 's32[1]{0}', space=sflag, size = 0x4, scoped, tag = 'scoped memory for tpu_custom_call.1']
    #allocation9 [shape = 'u8[196608]{0}', space=vmem, size = 0x30000, scoped, tag = 'input window, operand 2, single buffered']
    #allocation10 [shape = 'u8[524288]{0}', space=vmem, size = 0x80000, scoped, tag = 'input window, operand 5, single buffered']
    #allocation11 [shape = 's32[1]{0}', space=sflag, size = 0x4, scoped, tag = 'scoped memory for tpu_custom_call.1']
    #allocation12 [shape = 'u8[4096]{0}', space=vmem, size = 0x1000, scoped, tag = 'output window, operand 0, single buffered']
    %12 = vsyncpa [#allocation5], 0
    %13 = vsyncpa [#allocation8], 0
    %14 = vsyncpa [#allocation11], 0
    %15 = vsyncpa [#allocation6], 0
    // Predicated region
    $region2: #{tpu_custom_call.1} parent=1 // pred_check
      _
    $region3: #{tpu_custom_call.1} parent=1 // pred_check_branch
      %17 = sbr.rel (0) target = $region5
    $region4: #{tpu_custom_call.1} parent=1 // pred_region
      %s19 = ssub.s32 1024, 1024
      %20 = vsyncadd [#allocation5], %s19
      %s21 = sshll.u32 [#allocation4], 4
      %s22 = int_to_ptr.vmem [resolvable:$true] %s21
      %27 = dma.hbm_to_vmem [thread:$0]  %s0, 1024, %s22, [#allocation5], 128, 128, 8
    $region5: #{tpu_custom_call.1} parent=1 // pred_fallthru
      _
    // Predicated region
    $region6: #{tpu_custom_call.1} parent=1 // pred_check
      _
    $region7: #{tpu_custom_call.1} parent=1 // pred_check_branch
      %29 = sbr.rel (0) target = $region9
    $region8: #{tpu_custom_call.1} parent=1 // pred_region
      %s31 = ssub.s32 6144, 6144
      %32 = vsyncadd [#allocation8], %s31
      %s33 = sshll.u32 [#allocation7], 4
      %s34 = int_to_ptr.vmem [resolvable:$true] %s33
      %39 = dma.hbm_to_vmem [thread:$0]  %s1, 6144, %s34, [#allocation8], 384, 384, 24
    $region9: #{tpu_custom_call.1} parent=1 // pred_fallthru
      _
    // Predicated region
    $region10: #{tpu_custom_call.1} parent=1 // pred_check
      _
    $region11: #{tpu_custom_call.1} parent=1 // pred_check_branch
      %41 = sbr.rel (0) target = $region13
    $region12: #{tpu_custom_call.1} parent=1 // pred_region
      %s43 = ssub.s32 6144, 6144
      %44 = vsyncadd [#allocation8], %s43
      %s45 = sshll.u32 [#allocation9], 4
      %s46 = int_to_ptr.vmem [resolvable:$true] %s45
      %51 = dma.hbm_to_vmem [thread:$0]  %s2, 6144, %s46, [#allocation8], 384, 384, 24
    $region13: #{tpu_custom_call.1} parent=1 // pred_fallthru
      _
    // Predicated region
    $region14: #{tpu_custom_call.1} parent=1 // pred_check
      _
    $region15: #{tpu_custom_call.1} parent=1 // pred_check_branch
      %53 = sbr.rel (0) target = $region17
    $region16: #{tpu_custom_call.1} parent=1 // pred_region
      _
    $region17: #{tpu_custom_call.1} parent=1 // pred_fallthru
      _
    // Predicated region
    $region18: #{tpu_custom_call.1} parent=1 // pred_check
      _
    $region19: #{tpu_custom_call.1} parent=1 // pred_check_branch
      %55 = sbr.rel (0) target = $region21
    $region20: #{tpu_custom_call.1} parent=1 // pred_region
      _
    $region21: #{tpu_custom_call.1} parent=1 // pred_fallthru
      _
    // Predicated region
    $region22: #{tpu_custom_call.1} parent=1 // pred_check
      _
    $region23: #{tpu_custom_call.1} parent=1 // pred_check_branch
      %57 = sbr.rel (0) target = $region25
    $region24: #{tpu_custom_call.1} parent=1 // pred_region
      %s59 = ssub.s32 16384, 16384
      %60 = vsyncadd [#allocation11], %s59
      %s61 = sshll.u32 [#allocation10], 4
      %s62 = int_to_ptr.vmem [resolvable:$true] %s61
      %67 = dma.hbm_to_vmem [thread:$0]  %s5, 16384, %s62, [#allocation11], 128, 128, 8
    $region25: #{tpu_custom_call.1} parent=1 // pred_fallthru
      _
    // Predicated region
    $region26: #{tpu_custom_call.1} parent=1 // pred_check
      _
    $region27: #{tpu_custom_call.1} parent=1 // pred_check_branch
      %69 = sbr.rel (0) target = $region29
    $region28: #{tpu_custom_call.1} parent=1 // pred_region
      _
    $region29: #{tpu_custom_call.1} parent=1 // pred_fallthru
      _
    // Predicated region
    $region30: #{tpu_custom_call.1} parent=1 // pred_check
      _
    $region31: #{tpu_custom_call.1} parent=1 // pred_check_branch
      %71 = sbr.rel (0) target = $region33
    $region32: #{tpu_custom_call.1} parent=1 // pred_region
      %72 = dma.done [#allocation5], 1024
    $region33: #{tpu_custom_call.1} parent=1 // pred_fallthru
      _
    // Predicated region
    $region34: #{tpu_custom_call.1} parent=1 // pred_check
      _
    $region35: #{tpu_custom_call.1} parent=1 // pred_check_branch
      %74 = sbr.rel (0) target = $region37
    $region36: #{tpu_custom_call.1} parent=1 // pred_region
      %75 = dma.done [#allocation8], 6144
    $region37: #{tpu_custom_call.1} parent=1 // pred_fallthru
      _
    // Predicated region
    $region38: #{tpu_custom_call.1} parent=1 // pred_check
      _
    $region39: #{tpu_custom_call.1} parent=1 // pred_check_branch
      %77 = sbr.rel (0) target = $region41
    $region40: #{tpu_custom_call.1} parent=1 // pred_region
      %78 = dma.done [#allocation8], 6144
    $region41: #{tpu_custom_call.1} parent=1 // pred_fallthru
      _
    // Predicated region
    $region42: #{tpu_custom_call.1} parent=1 // pred_check
      _
    $region43: #{tpu_custom_call.1} parent=1 // pred_check_branch
      %80 = sbr.rel (0) target = $region45
    $region44: #{tpu_custom_call.1} parent=1 // pred_region
      %81 = dma.done [#allocation11], 16384
    $region45: #{tpu_custom_call.1} parent=1 // pred_fallthru
      _
    %v82 = vld [vmem:[#allocation4] sm:$0xff]
    %v83 = vld [vmem:[#allocation4 + $0x8] sm:$0xff]
    %v84 = vld [vmem:[#allocation4 + $0x10] sm:$0xff]
    %v85 = vld [vmem:[#allocation4 + $0x18] sm:$0xff]
    %v86 = vld [vmem:[#allocation4 + $0x20] sm:$0xff]
    %v87 = vld [vmem:[#allocation4 + $0x28] sm:$0xff]
    %v88 = vld [vmem:[#allocation4 + $0x30] sm:$0xff]
    %v89 = vld [vmem:[#allocation4 + $0x38] sm:$0xff]
    %v90 = vld [vmem:[#allocation7] sm:$0xff]
    %v91 = vld [vmem:[#allocation7 + $0x8] sm:$0xff]
    %v92 = vld [vmem:[#allocation7 + $0x10] sm:$0xff]
    %v93 = vld [vmem:[#allocation7 + $0x18] sm:$0xff]
    %v94 = vld [vmem:[#allocation7 + $0x20] sm:$0xff]
    %v95 = vld [vmem:[#allocation7 + $0x28] sm:$0xff]
    %v96 = vld [vmem:[#allocation7 + $0x30] sm:$0xff]
    %v97 = vld [vmem:[#allocation7 + $0x38] sm:$0xff]
    %v98 = vld [vmem:[#allocation7 + $0x40] sm:$0xff]
    %v99 = vld [vmem:[#allocation7 + $0x48] sm:$0xff]
    %v100 = vld [vmem:[#allocation7 + $0x50] sm:$0xff]
    %v101 = vld [vmem:[#allocation7 + $0x58] sm:$0xff]
    %v102 = vld [vmem:[#allocation7 + $0x60] sm:$0xff]
    %v103 = vld [vmem:[#allocation7 + $0x68] sm:$0xff]
    %v104 = vld [vmem:[#allocation7 + $0x70] sm:$0xff]
    %v105 = vld [vmem:[#allocation7 + $0x78] sm:$0xff]
    %v106 = vld [vmem:[#allocation7 + $0x80] sm:$0xff]
    %v107 = vld [vmem:[#allocation7 + $0x88] sm:$0xff]
    %v108 = vld [vmem:[#allocation7 + $0x90] sm:$0xff]
    %v109 = vld [vmem:[#allocation7 + $0x98] sm:$0xff]
    %v110 = vld [vmem:[#allocation7 + $0xa0] sm:$0xff]
    %v111 = vld [vmem:[#allocation7 + $0xa8] sm:$0xff]
    %v112 = vld [vmem:[#allocation7 + $0xb0] sm:$0xff]
    %v113 = vld [vmem:[#allocation7 + $0xb8] sm:$0xff]
    %v114 = vld [vmem:[#allocation7 + $0xc0] sm:$0xff]
    %v115 = vld [vmem:[#allocation7 + $0xc8] sm:$0xff]
    %v116 = vld [vmem:[#allocation7 + $0xd0] sm:$0xff]
    %v117 = vld [vmem:[#allocation7 + $0xd8] sm:$0xff]
    %v118 = vld [vmem:[#allocation7 + $0xe0] sm:$0xff]
    %v119 = vld [vmem:[#allocation7 + $0xe8] sm:$0xff]
    %v120 = vld [vmem:[#allocation7 + $0xf0] sm:$0xff]
    %v121 = vld [vmem:[#allocation7 + $0xf8] sm:$0xff]
    %v122 = vld [vmem:[#allocation7 + $0x100] sm:$0xff]
    %v123 = vld [vmem:[#allocation7 + $0x108] sm:$0xff]
    %v124 = vld [vmem:[#allocation7 + $0x110] sm:$0xff]
    %v125 = vld [vmem:[#allocation7 + $0x118] sm:$0xff]
    %v126 = vld [vmem:[#allocation7 + $0x120] sm:$0xff]
    %v127 = vld [vmem:[#allocation7 + $0x128] sm:$0xff]
    %v128 = vld [vmem:[#allocation7 + $0x130] sm:$0xff]
    %v129 = vld [vmem:[#allocation7 + $0x138] sm:$0xff]
    %v130 = vld [vmem:[#allocation7 + $0x140] sm:$0xff]
    %v131 = vld [vmem:[#allocation7 + $0x148] sm:$0xff]
    %v132 = vld [vmem:[#allocation7 + $0x150] sm:$0xff]
    %v133 = vld [vmem:[#allocation7 + $0x158] sm:$0xff]
    %v134 = vld [vmem:[#allocation7 + $0x160] sm:$0xff]
    %v135 = vld [vmem:[#allocation7 + $0x168] sm:$0xff]
    %v136 = vld [vmem:[#allocation7 + $0x170] sm:$0xff]
    %v137 = vld [vmem:[#allocation7 + $0x178] sm:$0xff]
    %v138 = vld [vmem:[%s3] sm:$0x7]
    %v140 = vlaneseq
    %v141 = vshrl.u32 %v140, 7
    %v142 = vsub.s32 0, %v141
    %v143 = vrot.slane %v138, %v142
    %v144 = vlaneseq
    %v145 = vshrl.u32 %v144, 7
    %v146 = vsub.s32 1, %v145
    %v147 = vrot.slane %v138, %v146
    %v148 = vlaneseq
    %v149 = vshrl.u32 %v148, 7
    %v150 = vsub.s32 2, %v149
    %v151 = vrot.slane %v138, %v150
    %155 = vmatprep.subr.mxu0 %v136
    %156 = vmatpush1.msra.mxu0 %v135
    %157 = vmatprep.subr.mxu0 %v133
    %158 = vmatpush1.msra.mxu0 %v132
    %159 = vmatprep.subr.mxu0 %v130
    %160 = vmatpush1.msra.mxu0 %v129
    %161 = vmatprep.subr.mxu0 %v127
    %162 = vmatpush1.msra.mxu0 %v126
    %163 = vmatprep.subr.mxu0 %v124
    %164 = vmatpush1.msra.mxu0 %v123
    %165 = vmatprep.subr.mxu0 %v121
    %166 = vmatpush1.msra.mxu0 %v120
    %167 = vmatprep.subr.mxu0 %v118
    %168 = vmatpush1.msra.mxu0 %v117
    %169 = vmatprep.subr.mxu0 %v115
    %170 = vmatpush1.msra.mxu0 %v114
    %171 = vmatprep.subr.mxu0 %v112
    %172 = vmatpush1.msra.mxu0 %v111
    %173 = vmatprep.subr.mxu0 %v109
    %174 = vmatpush1.msra.mxu0 %v108
    %175 = vmatprep.subr.mxu0 %v106
    %176 = vmatpush1.msra.mxu0 %v105
    %177 = vmatprep.subr.mxu0 %v103
    %178 = vmatpush1.msra.mxu0 %v102
    %179 = vmatprep.subr.mxu0 %v100
    %180 = vmatpush1.msra.mxu0 %v99
    %181 = vmatprep.subr.mxu0 %v97
    %182 = vmatpush1.msra.mxu0 %v96
    %183 = vmatprep.subr.mxu0 %v94
    %184 = vmatpush1.msra.mxu0 %v93
    %185 = vmatprep.subr.mxu0 %v91
    %186 = vmatpush1.msra.mxu0 %v90
    %187 = vmatprep.subr.mxu0 0.0
    %188 = vmatpush2.msra.mxu0 0.0
    %189 = vmatprep.subr.mxu0 0.0
    %190 = vmatpush2.msra.mxu0 0.0
    %191 = vmatprep.subr.mxu0 0.0
    %192 = vmatpush2.msra.mxu0 0.0
    %193 = vmatprep.subr.mxu0 0.0
    %194 = vmatpush2.msra.mxu0 0.0
    %195 = vmatprep.subr.mxu0 0.0
    %196 = vmatpush2.msra.mxu0 0.0
    %197 = vmatprep.subr.mxu0 0.0
    %198 = vmatpush2.msra.mxu0 0.0
    %199 = vmatprep.subr.mxu0 0.0
    %200 = vmatpush2.msra.mxu0 0.0
    %201 = vmatprep.subr.mxu0 0.0
    %202 = vmatpush2.msra.mxu0 0.0
    %203 = vmatprep.subr.mxu0 0.0
    %204 = vmatpush2.msra.mxu0 0.0
    %205 = vmatprep.subr.mxu0 0.0
    %206 = vmatpush2.msra.mxu0 0.0
    %207 = vmatprep.subr.mxu0 0.0
    %208 = vmatpush2.msra.mxu0 0.0
    %209 = vmatprep.subr.mxu0 0.0
    %210 = vmatpush2.msra.mxu0 0.0
    %211 = vmatprep.subr.mxu0 0.0
    %212 = vmatpush2.msra.mxu0 0.0
    %213 = vmatprep.subr.mxu0 0.0
    %214 = vmatpush2.msra.mxu0 0.0
    %215 = vmatprep.subr.mxu0 0.0
    %216 = vmatpush2.msra.mxu0 0.0
    %217 = vmatprep.subr.mxu0 0.0
    %218 = vmatpush2.msra.mxu0 0.0
    %219 = vmatprep.mubr.f32.mxu0 0.0
    %220 = vmatmul.mubr.f32.gmra.mxu0 %v82
    %v221 = vpop.f32.mrf.mxu0
    %v222 = vadd.f32 %v143, %v221
    %v223 = vpop.f32.mrf.mxu0
    %v224 = vadd.f32 %v147, %v223
    %225 = vmatprep.mubr.f32.mxu0 0.0
    %226 = vmatmul.mubr.f32.gmra.mxu0 %v83
    %v227 = vpop.f32.mrf.mxu0
    %v228 = vadd.f32 %v143, %v227
    %v229 = vpop.f32.mrf.mxu0
    %v230 = vadd.f32 %v147, %v229
    %231 = vmatprep.mubr.f32.mxu0 0.0
    %232 = vmatmul.mubr.f32.gmra.mxu0 %v84
    %v233 = vpop.f32.mrf.mxu0
    %v234 = vadd.f32 %v143, %v233
    %v235 = vpop.f32.mrf.mxu0
    %v236 = vadd.f32 %v147, %v235
    %237 = vmatprep.mubr.f32.mxu0 0.0
    %238 = vmatmul.mubr.f32.gmra.mxu0 %v85
    %v239 = vpop.f32.mrf.mxu0
    %v240 = vadd.f32 %v143, %v239
    %v241 = vpop.f32.mrf.mxu0
    %v242 = vadd.f32 %v147, %v241
    %243 = vmatprep.mubr.f32.mxu0 0.0
    %244 = vmatmul.mubr.f32.gmra.mxu0 %v86
    %v245 = vpop.f32.mrf.mxu0
    %v246 = vadd.f32 %v143, %v245
    %v247 = vpop.f32.mrf.mxu0
    %v248 = vadd.f32 %v147, %v247
    %249 = vmatprep.mubr.f32.mxu0 0.0
    %250 = vmatmul.mubr.f32.gmra.mxu0 %v87
    %v251 = vpop.f32.mrf.mxu0
    %v252 = vadd.f32 %v143, %v251
    %v253 = vpop.f32.mrf.mxu0
    %v254 = vadd.f32 %v147, %v253
    %255 = vmatprep.mubr.f32.mxu0 0.0
    %256 = vmatmul.mubr.f32.gmra.mxu0 %v88
    %v257 = vpop.f32.mrf.mxu0
    %v258 = vadd.f32 %v143, %v257
    %v259 = vpop.f32.mrf.mxu0
    %v260 = vadd.f32 %v147, %v259
    %261 = vmatprep.mubr.f32.mxu0 0.0
    %262 = vmatmul.mubr.f32.gmra.mxu0 %v89
    %v263 = vpop.f32.mrf.mxu0
    %v264 = vadd.f32 %v143, %v263
    %v265 = vpop.f32.mrf.mxu0
    %v266 = vadd.f32 %v147, %v265
    %267 = vdwg.mxu0
    %268 = vmatprep.subr.mxu0 0.0
    %269 = vmatpush1.msra.mxu0 %v137
    %270 = vmatprep.subr.mxu0 0.0
    %271 = vmatpush1.msra.mxu0 %v134
    %272 = vmatprep.subr.mxu0 0.0
    %273 = vmatpush1.msra.mxu0 %v131
    %274 = vmatprep.subr.mxu0 0.0
    %275 = vmatpush1.msra.mxu0 %v128
    %276 = vmatprep.subr.mxu0 0.0
    %277 = vmatpush1.msra.mxu0 %v125
    %278 = vmatprep.subr.mxu0 0.0
    %279 = vmatpush1.msra.mxu0 %v122
    %280 = vmatprep.subr.mxu0 0.0
    %281 = vmatpush1.msra.mxu0 %v119
    %282 = vmatprep.subr.mxu0 0.0
    %283 = vmatpush1.msra.mxu0 %v116
    %284 = vmatprep.subr.mxu0 0.0
    %285 = vmatpush1.msra.mxu0 %v113
    %286 = vmatprep.subr.mxu0 0.0
    %287 = vmatpush1.msra.mxu0 %v110
    %288 = vmatprep.subr.mxu0 0.0
    %289 = vmatpush1.msra.mxu0 %v107
    %290 = vmatprep.subr.mxu0 0.0
    %291 = vmatpush1.msra.mxu0 %v104
    %292 = vmatprep.subr.mxu0 0.0
    %293 = vmatpush1.msra.mxu0 %v101
    %294 = vmatprep.subr.mxu0 0.0
    %295 = vmatpush1.msra.mxu0 %v98
    %296 = vmatprep.subr.mxu0 0.0
    %297 = vmatpush1.msra.mxu0 %v95
    %298 = vmatprep.subr.mxu0 0.0
    %299 = vmatpush1.msra.mxu0 %v92
    %300 = vmatprep.subr.mxu0 0.0
    %301 = vmatpush2.msra.mxu0 0.0
    %302 = vmatprep.subr.mxu0 0.0
    %303 = vmatpush2.msra.mxu0 0.0
    %304 = vmatprep.subr.mxu0 0.0
    %305 = vmatpush2.msra.mxu0 0.0
    %306 = vmatprep.subr.mxu0 0.0
    %307 = vmatpush2.msra.mxu0 0.0
    %308 = vmatprep.subr.mxu0 0.0
    %309 = vmatpush2.msra.mxu0 0.0
    %310 = vmatprep.subr.mxu0 0.0
    %311 = vmatpush2.msra.mxu0 0.0
    %312 = vmatprep.subr.mxu0 0.0
    %313 = vmatpush2.msra.mxu0 0.0
    %314 = vmatprep.subr.mxu0 0.0
    %315 = vmatpush2.msra.mxu0 0.0
    %316 = vmatprep.subr.mxu0 0.0
    %317 = vmatpush2.msra.mxu0 0.0
    %318 = vmatprep.subr.mxu0 0.0
    %319 = vmatpush2.msra.mxu0 0.0
    %320 = vmatprep.subr.mxu0 0.0
    %321 = vmatpush2.msra.mxu0 0.0
    %322 = vmatprep.subr.mxu0 0.0
    %323 = vmatpush2.msra.mxu0 0.0
    %324 = vmatprep.subr.mxu0 0.0
    %325 = vmatpush2.msra.mxu0 0.0
    %326 = vmatprep.subr.mxu0 0.0
    %327 = vmatpush2.msra.mxu0 0.0
    %328 = vmatprep.subr.mxu0 0.0
    %329 = vmatpush2.msra.mxu0 0.0
    %330 = vmatprep.subr.mxu0 0.0
    %331 = vmatpush2.msra.mxu0 0.0
    %332 = vmatprep.mubr.f32.mxu0 0.0
    %333 = vmatmul.mubr.f32.gmra.mxu0 %v82
    %v334 = vpop.f32.mrf.mxu0
    %v335 = vadd.f32 %v151, %v334
    %v336 = vpop.f32.mrf.mxu0
    %337 = vmatprep.mubr.f32.mxu0 0.0
    %338 = vmatmul.mubr.f32.gmra.mxu0 %v83
    %v339 = vpop.f32.mrf.mxu0
    %v340 = vadd.f32 %v151, %v339
    %v341 = vpop.f32.mrf.mxu0
    %342 = vmatprep.mubr.f32.mxu0 0.0
    %343 = vmatmul.mubr.f32.gmra.mxu0 %v84
    %v344 = vpop.f32.mrf.mxu0
    %v345 = vadd.f32 %v151, %v344
    %v346 = vpop.f32.mrf.mxu0
    %347 = vmatprep.mubr.f32.mxu0 0.0
    %348 = vmatmul.mubr.f32.gmra.mxu0 %v85
    %v349 = vpop.f32.mrf.mxu0
    %v350 = vadd.f32 %v151, %v349
    %v351 = vpop.f32.mrf.mxu0
    %352 = vmatprep.mubr.f32.mxu0 0.0
    %353 = vmatmul.mubr.f32.gmra.mxu0 %v86
    %v354 = vpop.f32.mrf.mxu0
    %v355 = vadd.f32 %v151, %v354
    %v356 = vpop.f32.mrf.mxu0
    %357 = vmatprep.mubr.f32.mxu0 0.0
    %358 = vmatmul.mubr.f32.gmra.mxu0 %v87
    %v359 = vpop.f32.mrf.mxu0
    %v360 = vadd.f32 %v151, %v359
    %v361 = vpop.f32.mrf.mxu0
    %362 = vmatprep.mubr.f32.mxu0 0.0
    %363 = vmatmul.mubr.f32.gmra.mxu0 %v88
    %v364 = vpop.f32.mrf.mxu0
    %v365 = vadd.f32 %v151, %v364
    %v366 = vpop.f32.mrf.mxu0
    %367 = vmatprep.mubr.f32.mxu0 0.0
    %368 = vmatmul.mubr.f32.gmra.mxu0 %v89
    %v369 = vpop.f32.mrf.mxu0
    %v370 = vadd.f32 %v151, %v369
    %v371 = vpop.f32.mrf.mxu0
    %372 = vdwg.mxu0
    %373 = vst [vmem:[#allocation2] sm:$0xff] %v222
    %374 = vst [vmem:[#allocation2 + $0x8] sm:$0xff] %v224
    %375 = vst [vmem:[#allocation2 + $0x10] sm:$0xff] %v335
    %376 = vst [vmem:[#allocation2 + $0x18] sm:$0xff] %v228
    %377 = vst [vmem:[#allocation2 + $0x20] sm:$0xff] %v230
    %378 = vst [vmem:[#allocation2 + $0x28] sm:$0xff] %v340
    %379 = vst [vmem:[#allocation2 + $0x30] sm:$0xff] %v234
    %380 = vst [vmem:[#allocation2 + $0x38] sm:$0xff] %v236
    %381 = vst [vmem:[#allocation2 + $0x40] sm:$0xff] %v345
    %382 = vst [vmem:[#allocation2 + $0x48] sm:$0xff] %v240
    %383 = vst [vmem:[#allocation2 + $0x50] sm:$0xff] %v242
    %384 = vst [vmem:[#allocation2 + $0x58] sm:$0xff] %v350
    %385 = vst [vmem:[#allocation2 + $0x60] sm:$0xff] %v246
    %386 = vst [vmem:[#allocation2 + $0x68] sm:$0xff] %v248
    %387 = vst [vmem:[#allocation2 + $0x70] sm:$0xff] %v355
    %388 = vst [vmem:[#allocation2 + $0x78] sm:$0xff] %v252
    %389 = vst [vmem:[#allocation2 + $0x80] sm:$0xff] %v254
    %390 = vst [vmem:[#allocation2 + $0x88] sm:$0xff] %v360
    %391 = vst [vmem:[#allocation2 + $0x90] sm:$0xff] %v258
    %392 = vst [vmem:[#allocation2 + $0x98] sm:$0xff] %v260
    %393 = vst [vmem:[#allocation2 + $0xa0] sm:$0xff] %v365
    %394 = vst [vmem:[#allocation2 + $0xa8] sm:$0xff] %v264
    %395 = vst [vmem:[#allocation2 + $0xb0] sm:$0xff] %v266
    %396 = vst [vmem:[#allocation2 + $0xb8] sm:$0xff] %v370
    %v397 = vld [vmem:[#allocation9] sm:$0xff]
    %v398 = vld [vmem:[#allocation9 + $0x8] sm:$0xff]
    %v399 = vld [vmem:[#allocation9 + $0x10] sm:$0xff]
    %v400 = vld [vmem:[#allocation9 + $0x18] sm:$0xff]
    %v401 = vld [vmem:[#allocation9 + $0x20] sm:$0xff]
    %v402 = vld [vmem:[#allocation9 + $0x28] sm:$0xff]
    %v403 = vld [vmem:[#allocation9 + $0x30] sm:$0xff]
    %v404 = vld [vmem:[#allocation9 + $0x38] sm:$0xff]
    %v405 = vld [vmem:[#allocation9 + $0x40] sm:$0xff]
    %v406 = vld [vmem:[#allocation9 + $0x48] sm:$0xff]
    %v407 = vld [vmem:[#allocation9 + $0x50] sm:$0xff]
    %v408 = vld [vmem:[#allocation9 + $0x58] sm:$0xff]
    %v409 = vld [vmem:[#allocation9 + $0x60] sm:$0xff]
    %v410 = vld [vmem:[#allocation9 + $0x68] sm:$0xff]
    %v411 = vld [vmem:[#allocation9 + $0x70] sm:$0xff]
    %v412 = vld [vmem:[#allocation9 + $0x78] sm:$0xff]
    %v413 = vld [vmem:[#allocation9 + $0x80] sm:$0xff]
    %v414 = vld [vmem:[#allocation9 + $0x88] sm:$0xff]
    %v415 = vld [vmem:[#allocation9 + $0x90] sm:$0xff]
    %v416 = vld [vmem:[#allocation9 + $0x98] sm:$0xff]
    %v417 = vld [vmem:[#allocation9 + $0xa0] sm:$0xff]
    %v418 = vld [vmem:[#allocation9 + $0xa8] sm:$0xff]
    %v419 = vld [vmem:[#allocation9 + $0xb0] sm:$0xff]
    %v420 = vld [vmem:[#allocation9 + $0xb8] sm:$0xff]
    %v421 = vld [vmem:[#allocation9 + $0xc0] sm:$0xff]
    %v422 = vld [vmem:[#allocation9 + $0xc8] sm:$0xff]
    %v423 = vld [vmem:[#allocation9 + $0xd0] sm:$0xff]
    %v424 = vld [vmem:[#allocation9 + $0xd8] sm:$0xff]
    %v425 = vld [vmem:[#allocation9 + $0xe0] sm:$0xff]
    %v426 = vld [vmem:[#allocation9 + $0xe8] sm:$0xff]
    %v427 = vld [vmem:[#allocation9 + $0xf0] sm:$0xff]
    %v428 = vld [vmem:[#allocation9 + $0xf8] sm:$0xff]
    %v429 = vld [vmem:[#allocation9 + $0x100] sm:$0xff]
    %v430 = vld [vmem:[#allocation9 + $0x108] sm:$0xff]
    %v431 = vld [vmem:[#allocation9 + $0x110] sm:$0xff]
    %v432 = vld [vmem:[#allocation9 + $0x118] sm:$0xff]
    %v433 = vld [vmem:[#allocation9 + $0x120] sm:$0xff]
    %v434 = vld [vmem:[#allocation9 + $0x128] sm:$0xff]
    %v435 = vld [vmem:[#allocation9 + $0x130] sm:$0xff]
    %v436 = vld [vmem:[#allocation9 + $0x138] sm:$0xff]
    %v437 = vld [vmem:[#allocation9 + $0x140] sm:$0xff]
    %v438 = vld [vmem:[#allocation9 + $0x148] sm:$0xff]
    %v439 = vld [vmem:[#allocation9 + $0x150] sm:$0xff]
    %v440 = vld [vmem:[#allocation9 + $0x158] sm:$0xff]
    %v441 = vld [vmem:[#allocation9 + $0x160] sm:$0xff]
    %v442 = vld [vmem:[#allocation9 + $0x168] sm:$0xff]
    %v443 = vld [vmem:[#allocation9 + $0x170] sm:$0xff]
    %v444 = vld [vmem:[#allocation9 + $0x178] sm:$0xff]
    %v445 = vld [vmem:[%s4] sm:$0x1]
    %s446 = smul.u32 0, 3
    %s447 = smul.addr %s446, 8
    %s448 = scalar_lea.vmem [#allocation2], %s447
    %v449 = vld [vmem:[%s448] sm:$0xff]
    %v450 = vld [vmem:[%s448 + $0x8] sm:$0xff]
    %v451 = vld [vmem:[%s448 + $0x10] sm:$0xff]
    %452 = vmatprep.subr.mxu0 %v443
    %453 = vmatpush1.msra.mxu0 %v442
    %454 = vmatprep.subr.mxu0 %v440
    %455 = vmatpush1.msra.mxu0 %v439
    %456 = vmatprep.subr.mxu0 %v437
    %457 = vmatpush1.msra.mxu0 %v436
    %458 = vmatprep.subr.mxu0 %v434
    %459 = vmatpush1.msra.mxu0 %v433
    %460 = vmatprep.subr.mxu0 %v431
    %461 = vmatpush1.msra.mxu0 %v430
    %462 = vmatprep.subr.mxu0 %v428
    %463 = vmatpush1.msra.mxu0 %v427
    %464 = vmatprep.subr.mxu0 %v425
    %465 = vmatpush1.msra.mxu0 %v424
    %466 = vmatprep.subr.mxu0 %v422
    %467 = vmatpush1.msra.mxu0 %v421
    %468 = vmatprep.subr.mxu0 %v419
    %469 = vmatpush1.msra.mxu0 %v418
    %470 = vmatprep.subr.mxu0 %v416
    %471 = vmatpush1.msra.mxu0 %v415
    %472 = vmatprep.subr.mxu0 %v413
    %473 = vmatpush1.msra.mxu0 %v412
    %474 = vmatprep.subr.mxu0 %v410
    %475 = vmatpush1.msra.mxu0 %v409
    %476 = vmatprep.subr.mxu0 %v407
    %477 = vmatpush1.msra.mxu0 %v406
    %478 = vmatprep.subr.mxu0 %v404
    %479 = vmatpush1.msra.mxu0 %v403
    %480 = vmatprep.subr.mxu0 %v401
    %481 = vmatpush1.msra.mxu0 %v400
    %482 = vmatprep.subr.mxu0 %v398
    %483 = vmatpush1.msra.mxu0 %v397
    %484 = vmatprep.subr.mxu0 0.0
    %485 = vmatpush2.msra.mxu0 0.0
    %486 = vmatprep.subr.mxu0 0.0
    %487 = vmatpush2.msra.mxu0 0.0
    %488 = vmatprep.subr.mxu0 0.0
    %489 = vmatpush2.msra.mxu0 0.0
    %490 = vmatprep.subr.mxu0 0.0
    %491 = vmatpush2.msra.mxu0 0.0
    %492 = vmatprep.subr.mxu0 0.0
    %493 = vmatpush2.msra.mxu0 0.0
    %494 = vmatprep.subr.mxu0 0.0
    %495 = vmatpush2.msra.mxu0 0.0
    %496 = vmatprep.subr.mxu0 0.0
    %497 = vmatpush2.msra.mxu0 0.0
    %498 = vmatprep.subr.mxu0 0.0
    %499 = vmatpush2.msra.mxu0 0.0
    %500 = vmatprep.subr.mxu0 0.0
    %501 = vmatpush2.msra.mxu0 0.0
    %502 = vmatprep.subr.mxu0 0.0
    %503 = vmatpush2.msra.mxu0 0.0
    %504 = vmatprep.subr.mxu0 0.0
    %505 = vmatpush2.msra.mxu0 0.0
    %506 = vmatprep.subr.mxu0 0.0
    %507 = vmatpush2.msra.mxu0 0.0
    %508 = vmatprep.subr.mxu0 0.0
    %509 = vmatpush2.msra.mxu0 0.0
    %510 = vmatprep.subr.mxu0 0.0
    %511 = vmatpush2.msra.mxu0 0.0
    %512 = vmatprep.subr.mxu0 0.0
    %513 = vmatpush2.msra.mxu0 0.0
    %514 = vmatprep.subr.mxu0 0.0
    %515 = vmatpush2.msra.mxu0 0.0
    %516 = vmatprep.mubr.f32.mxu0 0.0
    %517 = vmatmul.mubr.f32.gmra.mxu0 0.0
    %v518 = vpop.f32.mrf.mxu0
    %v519 = vadd.f32 0.0, %v518
    %v520 = vpop.f32.mrf.mxu0
    %v521 = vadd.f32 0.0, %v520
    %522 = vdwg.mxu0
    %523 = vmatprep.subr.mxu0 0.0
    %524 = vmatpush1.msra.mxu0 %v444
    %525 = vmatprep.subr.mxu0 0.0
    %526 = vmatpush1.msra.mxu0 %v441
    %527 = vmatprep.subr.mxu0 0.0
    %528 = vmatpush1.msra.mxu0 %v438
    %529 = vmatprep.subr.mxu0 0.0
    %530 = vmatpush1.msra.mxu0 %v435
    %531 = vmatprep.subr.mxu0 0.0
    %532 = vmatpush1.msra.mxu0 %v432
    %533 = vmatprep.subr.mxu0 0.0
    %534 = vmatpush1.msra.mxu0 %v429
    %535 = vmatprep.subr.mxu0 0.0
    %536 = vmatpush1.msra.mxu0 %v426
    %537 = vmatprep.subr.mxu0 0.0
    %538 = vmatpush1.msra.mxu0 %v423
    %539 = vmatprep.subr.mxu0 0.0
    %540 = vmatpush1.msra.mxu0 %v420
    %541 = vmatprep.subr.mxu0 0.0
    %542 = vmatpush1.msra.mxu0 %v417
    %543 = vmatprep.subr.mxu0 0.0
    %544 = vmatpush1.msra.mxu0 %v414
    %545 = vmatprep.subr.mxu0 0.0
    %546 = vmatpush1.msra.mxu0 %v411
    %547 = vmatprep.subr.mxu0 0.0
    %548 = vmatpush1.msra.mxu0 %v408
    %549 = vmatprep.subr.mxu0 0.0
    %550 = vmatpush1.msra.mxu0 %v405
    %551 = vmatprep.subr.mxu0 0.0
    %552 = vmatpush1.msra.mxu0 %v402
    %553 = vmatprep.subr.mxu0 0.0
    %554 = vmatpush1.msra.mxu0 %v399
    %555 = vmatprep.subr.mxu0 0.0
    %556 = vmatpush2.msra.mxu0 0.0
    %557 = vmatprep.subr.mxu0 0.0
    %558 = vmatpush2.msra.mxu0 0.0
    %559 = vmatprep.subr.mxu0 0.0
    %560 = vmatpush2.msra.mxu0 0.0
    %561 = vmatprep.subr.mxu0 0.0
    %562 = vmatpush2.msra.mxu0 0.0
    %563 = vmatprep.subr.mxu0 0.0
    %564 = vmatpush2.msra.mxu0 0.0
    %565 = vmatprep.subr.mxu0 0.0
    %566 = vmatpush2.msra.mxu0 0.0
    %567 = vmatprep.subr.mxu0 0.0
    %568 = vmatpush2.msra.mxu0 0.0
    %569 = vmatprep.subr.mxu0 0.0
    %570 = vmatpush2.msra.mxu0 0.0
    %571 = vmatprep.subr.mxu0 0.0
    %572 = vmatpush2.msra.mxu0 0.0
    %573 = vmatprep.subr.mxu0 0.0
    %574 = vmatpush2.msra.mxu0 0.0
    %575 = vmatprep.subr.mxu0 0.0
    %576 = vmatpush2.msra.mxu0 0.0
    %577 = vmatprep.subr.mxu0 0.0
    %578 = vmatpush2.msra.mxu0 0.0
    %579 = vmatprep.subr.mxu0 0.0
    %580 = vmatpush2.msra.mxu0 0.0
    %581 = vmatprep.subr.mxu0 0.0
    %582 = vmatpush2.msra.mxu0 0.0
    %583 = vmatprep.subr.mxu0 0.0
    %584 = vmatpush2.msra.mxu0 0.0
    %585 = vmatprep.subr.mxu0 0.0
    %586 = vmatpush2.msra.mxu0 0.0
    %587 = vmatprep.mubr.f32.mxu0 0.0
    %588 = vmatmul.mubr.f32.gmra.mxu0 0.0
    %v589 = vpop.f32.mrf.mxu0
    %v590 = vadd.f32 0.0, %v589
    %v591 = vpop.f32.mrf.mxu0
    %592 = vdwg.mxu0
    %v593 = vadd.f32 %v449, %v519
    %v594 = vxor.u32 %v593, 2147483648
    %v595 = vmul.f32 %v594, 1.442695
    %v596 = vpow.pop %v595
    %v597 = vadd.f32 %v596, 1.0
    %v598 = vrcp.pop %v597
    %v599 = vmul.f32 1.0, %v598
    %v600 = vadd.f32 %v450, %v521
    %v601 = vxor.u32 %v600, 2147483648
    %v602 = vmul.f32 %v601, 1.442695
    %v603 = vpow.pop %v602
    %v604 = vadd.f32 %v603, 1.0
    %v605 = vrcp.pop %v604
    %v606 = vmul.f32 1.0, %v605
    %v608 = vlaneseq
    %v609 = vshrl.u32 %v608, 7
    %v610 = vsub.s32 0, %v609
    %v611 = vrot.slane %v445, %v610
    %v613 = vadd.f32 %v590, %v611
    %v614 = vmul.f32 %v599, %v613
    %v615 = vadd.f32 %v451, %v614
    %v616 = vtanh.pop %v615
    %v617 = vsub.f32 1.0, %v606
    %v618 = vmul.f32 %v617, %v616
    %v619 = vmul.f32 %v606, 0.0
    %v620 = vadd.f32 %v618, %v619
    %621 = vst [vmem:[#allocation3] sm:$0xff] %v620
    %s622 = smul.u32 1, 3
    %s623 = smul.addr %s622, 8
    %s624 = scalar_lea.vmem [#allocation2], %s623
    %v625 = vld [vmem:[%s624] sm:$0xff]
    %v626 = vld [vmem:[%s624 + $0x8] sm:$0xff]
    %v627 = vld [vmem:[%s624 + $0x10] sm:$0xff]
    %628 = vmatprep.subr.mxu0 %v443
    %629 = vmatpush1.msra.mxu0 %v442
    %630 = vmatprep.subr.mxu0 %v440
    %631 = vmatpush1.msra.mxu0 %v439
    %632 = vmatprep.subr.mxu0 %v437
    %633 = vmatpush1.msra.mxu0 %v436
    %634 = vmatprep.subr.mxu0 %v434
    %635 = vmatpush1.msra.mxu0 %v433
    %636 = vmatprep.subr.mxu0 %v431
    %637 = vmatpush1.msra.mxu0 %v430
    %638 = vmatprep.subr.mxu0 %v428
    %639 = vmatpush1.msra.mxu0 %v427
    %640 = vmatprep.subr.mxu0 %v425
    %641 = vmatpush1.msra.mxu0 %v424
    %642 = vmatprep.subr.mxu0 %v422
    %643 = vmatpush1.msra.mxu0 %v421
    %644 = vmatprep.subr.mxu0 %v419
    %645 = vmatpush1.msra.mxu0 %v418
    %646 = vmatprep.subr.mxu0 %v416
    %647 = vmatpush1.msra.mxu0 %v415
    %648 = vmatprep.subr.mxu0 %v413
    %649 = vmatpush1.msra.mxu0 %v412
    %650 = vmatprep.subr.mxu0 %v410
    %651 = vmatpush1.msra.mxu0 %v409
    %652 = vmatprep.subr.mxu0 %v407
    %653 = vmatpush1.msra.mxu0 %v406
    %654 = vmatprep.subr.mxu0 %v404
    %655 = vmatpush1.msra.mxu0 %v403
    %656 = vmatprep.subr.mxu0 %v401
    %657 = vmatpush1.msra.mxu0 %v400
    %658 = vmatprep.subr.mxu0 %v398
    %659 = vmatpush1.msra.mxu0 %v397
    %660 = vmatprep.subr.mxu0 0.0
    %661 = vmatpush2.msra.mxu0 0.0
    %662 = vmatprep.subr.mxu0 0.0
    %663 = vmatpush2.msra.mxu0 0.0
    %664 = vmatprep.subr.mxu0 0.0
    %665 = vmatpush2.msra.mxu0 0.0
    %666 = vmatprep.subr.mxu0 0.0
    %667 = vmatpush2.msra.mxu0 0.0
    %668 = vmatprep.subr.mxu0 0.0
    %669 = vmatpush2.msra.mxu0 0.0
    %670 = vmatprep.subr.mxu0 0.0
    %671 = vmatpush2.msra.mxu0 0.0
    %672 = vmatprep.subr.mxu0 0.0
    %673 = vmatpush2.msra.mxu0 0.0
    %674 = vmatprep.subr.mxu0 0.0
    %675 = vmatpush2.msra.mxu0 0.0
    %676 = vmatprep.subr.mxu0 0.0
    %677 = vmatpush2.msra.mxu0 0.0
    %678 = vmatprep.subr.mxu0 0.0
    %679 = vmatpush2.msra.mxu0 0.0
    %680 = vmatprep.subr.mxu0 0.0
    %681 = vmatpush2.msra.mxu0 0.0
    %682 = vmatprep.subr.mxu0 0.0
    %683 = vmatpush2.msra.mxu0 0.0
    %684 = vmatprep.subr.mxu0 0.0
    %685 = vmatpush2.msra.mxu0 0.0
    %686 = vmatprep.subr.mxu0 0.0
    %687 = vmatpush2.msra.mxu0 0.0
    %688 = vmatprep.subr.mxu0 0.0
    %689 = vmatpush2.msra.mxu0 0.0
    %690 = vmatprep.subr.mxu0 0.0
    %691 = vmatpush2.msra.mxu0 0.0
    %692 = vmatprep.mubr.f32.mxu0 0.0
    %693 = vmatmul.mubr.f32.gmra.mxu0 %v620
    %v694 = vpop.f32.mrf.mxu0
    %v695 = vadd.f32 0.0, %v694
    %v696 = vpop.f32.mrf.mxu0
    %v697 = vadd.f32 0.0, %v696
    %698 = vdwg.mxu0
    %699 = vmatprep.subr.mxu0 0.0
    %700 = vmatpush1.msra.mxu0 %v444
    %701 = vmatprep.subr.mxu0 0.0
    %702 = vmatpush1.msra.mxu0 %v441
    %703 = vmatprep.subr.mxu0 0.0
    %704 = vmatpush1.msra.mxu0 %v438
    %705 = vmatprep.subr.mxu0 0.0
    %706 = vmatpush1.msra.mxu0 %v435
    %707 = vmatprep.subr.mxu0 0.0
    %708 = vmatpush1.msra.mxu0 %v432
    %709 = vmatprep.subr.mxu0 0.0
    %710 = vmatpush1.msra.mxu0 %v429
    %711 = vmatprep.subr.mxu0 0.0
    %712 = vmatpush1.msra.mxu0 %v426
    %713 = vmatprep.subr.mxu0 0.0
    %714 = vmatpush1.msra.mxu0 %v423
    %715 = vmatprep.subr.mxu0 0.0
    %716 = vmatpush1.msra.mxu0 %v420
    %717 = vmatprep.subr.mxu0 0.0
    %718 = vmatpush1.msra.mxu0 %v417
    %719 = vmatprep.subr.mxu0 0.0
    %720 = vmatpush1.msra.mxu0 %v414
    %721 = vmatprep.subr.mxu0 0.0
    %722 = vmatpush1.msra.mxu0 %v411
    %723 = vmatprep.subr.mxu0 0.0
    %724 = vmatpush1.msra.mxu0 %v408
    %725 = vmatprep.subr.mxu0 0.0
    %726 = vmatpush1.msra.mxu0 %v405
    %727 = vmatprep.subr.mxu0 0.0
    %728 = vmatpush1.msra.mxu0 %v402
    %729 = vmatprep.subr.mxu0 0.0
    %730 = vmatpush1.msra.mxu0 %v399
    %731 = vmatprep.subr.mxu0 0.0
    %732 = vmatpush2.msra.mxu0 0.0
    %733 = vmatprep.subr.mxu0 0.0
    %734 = vmatpush2.msra.mxu0 0.0
    %735 = vmatprep.subr.mxu0 0.0
    %736 = vmatpush2.msra.mxu0 0.0
    %737 = vmatprep.subr.mxu0 0.0
    %738 = vmatpush2.msra.mxu0 0.0
    %739 = vmatprep.subr.mxu0 0.0
    %740 = vmatpush2.msra.mxu0 0.0
    %741 = vmatprep.subr.mxu0 0.0
    %742 = vmatpush2.msra.mxu0 0.0
    %743 = vmatprep.subr.mxu0 0.0
    %744 = vmatpush2.msra.mxu0 0.0
    %745 = vmatprep.subr.mxu0 0.0
    %746 = vmatpush2.msra.mxu0 0.0
    %747 = vmatprep.subr.mxu0 0.0
    %748 = vmatpush2.msra.mxu0 0.0
    %749 = vmatprep.subr.mxu0 0.0
    %750 = vmatpush2.msra.mxu0 0.0
    %751 = vmatprep.subr.mxu0 0.0
    %752 = vmatpush2.msra.mxu0 0.0
    %753 = vmatprep.subr.mxu0 0.0
    %754 = vmatpush2.msra.mxu0 0.0
    %755 = vmatprep.subr.mxu0 0.0
    %756 = vmatpush2.msra.mxu0 0.0
    %757 = vmatprep.subr.mxu0 0.0
    %758 = vmatpush2.msra.mxu0 0.0
    %759 = vmatprep.subr.mxu0 0.0
    %760 = vmatpush2.msra.mxu0 0.0
    %761 = vmatprep.subr.mxu0 0.0
    %762 = vmatpush2.msra.mxu0 0.0
    %763 = vmatprep.mubr.f32.mxu0 0.0
    %764 = vmatmul.mubr.f32.gmra.mxu0 %v620
    %v765 = vpop.f32.mrf.mxu0
    %v766 = vadd.f32 0.0, %v765
    %v767 = vpop.f32.mrf.mxu0
    %768 = vdwg.mxu0
    %v769 = vadd.f32 %v625, %v695
    %v770 = vxor.u32 %v769, 2147483648
    %v771 = vmul.f32 %v770, 1.442695
    %v772 = vpow.pop %v771
    %v773 = vadd.f32 %v772, 1.0
    %v774 = vrcp.pop %v773
    %v775 = vmul.f32 1.0, %v774
    %v776 = vadd.f32 %v626, %v697
    %v777 = vxor.u32 %v776, 2147483648
    %v778 = vmul.f32 %v777, 1.442695
    %v779 = vpow.pop %v778
    %v780 = vadd.f32 %v779, 1.0
    %v781 = vrcp.pop %v780
    %v782 = vmul.f32 1.0, %v781
    %v783 = vadd.f32 %v766, %v611
    %v784 = vmul.f32 %v775, %v783
    %v785 = vadd.f32 %v627, %v784
    %v786 = vtanh.pop %v785
    %v787 = vsub.f32 1.0, %v782
    %v788 = vmul.f32 %v787, %v786
    %v789 = vmul.f32 %v782, %v620
    %v790 = vadd.f32 %v788, %v789
    %s791 = scalar_lea.vmem [#allocation3], 8
    %792 = vst [vmem:[%s791] sm:$0xff] %v790
    %s793 = smul.u32 2, 3
    %s794 = smul.addr %s793, 8
    %s795 = scalar_lea.vmem [#allocation2], %s794
    %v796 = vld [vmem:[%s795] sm:$0xff]
    %v797 = vld [vmem:[%s795 + $0x8] sm:$0xff]
    %v798 = vld [vmem:[%s795 + $0x10] sm:$0xff]
    %799 = vmatprep.subr.mxu0 %v443
    %800 = vmatpush1.msra.mxu0 %v442
    %801 = vmatprep.subr.mxu0 %v440
    %802 = vmatpush1.msra.mxu0 %v439
    %803 = vmatprep.subr.mxu0 %v437
    %804 = vmatpush1.msra.mxu0 %v436
    %805 = vmatprep.subr.mxu0 %v434
    %806 = vmatpush1.msra.mxu0 %v433
    %807 = vmatprep.subr.mxu0 %v431
    %808 = vmatpush1.msra.mxu0 %v430
    %809 = vmatprep.subr.mxu0 %v428
    %810 = vmatpush1.msra.mxu0 %v427
    %811 = vmatprep.subr.mxu0 %v425
    %812 = vmatpush1.msra.mxu0 %v424
    %813 = vmatprep.subr.mxu0 %v422
    %814 = vmatpush1.msra.mxu0 %v421
    %815 = vmatprep.subr.mxu0 %v419
    %816 = vmatpush1.msra.mxu0 %v418
    %817 = vmatprep.subr.mxu0 %v416
    %818 = vmatpush1.msra.mxu0 %v415
    %819 = vmatprep.subr.mxu0 %v413
    %820 = vmatpush1.msra.mxu0 %v412
    %821 = vmatprep.subr.mxu0 %v410
    %822 = vmatpush1.msra.mxu0 %v409
    %823 = vmatprep.subr.mxu0 %v407
    %824 = vmatpush1.msra.mxu0 %v406
    %825 = vmatprep.subr.mxu0 %v404
    %826 = vmatpush1.msra.mxu0 %v403
    %827 = vmatprep.subr.mxu0 %v401
    %828 = vmatpush1.msra.mxu0 %v400
    %829 = vmatprep.subr.mxu0 %v398
    %830 = vmatpush1.msra.mxu0 %v397
    %831 = vmatprep.subr.mxu0 0.0
    %832 = vmatpush2.msra.mxu0 0.0
    %833 = vmatprep.subr.mxu0 0.0
    %834 = vmatpush2.msra.mxu0 0.0
    %835 = vmatprep.subr.mxu0 0.0
    %836 = vmatpush2.msra.mxu0 0.0
    %837 = vmatprep.subr.mxu0 0.0
    %838 = vmatpush2.msra.mxu0 0.0
    %839 = vmatprep.subr.mxu0 0.0
    %840 = vmatpush2.msra.mxu0 0.0
    %841 = vmatprep.subr.mxu0 0.0
    %842 = vmatpush2.msra.mxu0 0.0
    %843 = vmatprep.subr.mxu0 0.0
    %844 = vmatpush2.msra.mxu0 0.0
    %845 = vmatprep.subr.mxu0 0.0
    %846 = vmatpush2.msra.mxu0 0.0
    %847 = vmatprep.subr.mxu0 0.0
    %848 = vmatpush2.msra.mxu0 0.0
    %849 = vmatprep.subr.mxu0 0.0
    %850 = vmatpush2.msra.mxu0 0.0
    %851 = vmatprep.subr.mxu0 0.0
    %852 = vmatpush2.msra.mxu0 0.0
    %853 = vmatprep.subr.mxu0 0.0
    %854 = vmatpush2.msra.mxu0 0.0
    %855 = vmatprep.subr.mxu0 0.0
    %856 = vmatpush2.msra.mxu0 0.0
    %857 = vmatprep.subr.mxu0 0.0
    %858 = vmatpush2.msra.mxu0 0.0
    %859 = vmatprep.subr.mxu0 0.0
    %860 = vmatpush2.msra.mxu0 0.0
    %861 = vmatprep.subr.mxu0 0.0
    %862 = vmatpush2.msra.mxu0 0.0
    %863 = vmatprep.mubr.f32.mxu0 0.0
    %864 = vmatmul.mubr.f32.gmra.mxu0 %v790
    %v865 = vpop.f32.mrf.mxu0
    %v866 = vadd.f32 0.0, %v865
    %v867 = vpop.f32.mrf.mxu0
    %v868 = vadd.f32 0.0, %v867
    %869 = vdwg.mxu0
    %870 = vmatprep.subr.mxu0 0.0
    %871 = vmatpush1.msra.mxu0 %v444
    %872 = vmatprep.subr.mxu0 0.0
    %873 = vmatpush1.msra.mxu0 %v441
    %874 = vmatprep.subr.mxu0 0.0
    %875 = vmatpush1.msra.mxu0 %v438
    %876 = vmatprep.subr.mxu0 0.0
    %877 = vmatpush1.msra.mxu0 %v435
    %878 = vmatprep.subr.mxu0 0.0
    %879 = vmatpush1.msra.mxu0 %v432
    %880 = vmatprep.subr.mxu0 0.0
    %881 = vmatpush1.msra.mxu0 %v429
    %882 = vmatprep.subr.mxu0 0.0
    %883 = vmatpush1.msra.mxu0 %v426
    %884 = vmatprep.subr.mxu0 0.0
    %885 = vmatpush1.msra.mxu0 %v423
    %886 = vmatprep.subr.mxu0 0.0
    %887 = vmatpush1.msra.mxu0 %v420
    %888 = vmatprep.subr.mxu0 0.0
    %889 = vmatpush1.msra.mxu0 %v417
    %890 = vmatprep.subr.mxu0 0.0
    %891 = vmatpush1.msra.mxu0 %v414
    %892 = vmatprep.subr.mxu0 0.0
    %893 = vmatpush1.msra.mxu0 %v411
    %894 = vmatprep.subr.mxu0 0.0
    %895 = vmatpush1.msra.mxu0 %v408
    %896 = vmatprep.subr.mxu0 0.0
    %897 = vmatpush1.msra.mxu0 %v405
    %898 = vmatprep.subr.mxu0 0.0
    %899 = vmatpush1.msra.mxu0 %v402
    %900 = vmatprep.subr.mxu0 0.0
    %901 = vmatpush1.msra.mxu0 %v399
    %902 = vmatprep.subr.mxu0 0.0
    %903 = vmatpush2.msra.mxu0 0.0
    %904 = vmatprep.subr.mxu0 0.0
    %905 = vmatpush2.msra.mxu0 0.0
    %906 = vmatprep.subr.mxu0 0.0
    %907 = vmatpush2.msra.mxu0 0.0
    %908 = vmatprep.subr.mxu0 0.0
    %909 = vmatpush2.msra.mxu0 0.0
    %910 = vmatprep.subr.mxu0 0.0
    %911 = vmatpush2.msra.mxu0 0.0
    %912 = vmatprep.subr.mxu0 0.0
    %913 = vmatpush2.msra.mxu0 0.0
    %914 = vmatprep.subr.mxu0 0.0
    %915 = vmatpush2.msra.mxu0 0.0
    %916 = vmatprep.subr.mxu0 0.0
    %917 = vmatpush2.msra.mxu0 0.0
    %918 = vmatprep.subr.mxu0 0.0
    %919 = vmatpush2.msra.mxu0 0.0
    %920 = vmatprep.subr.mxu0 0.0
    %921 = vmatpush2.msra.mxu0 0.0
    %922 = vmatprep.subr.mxu0 0.0
    %923 = vmatpush2.msra.mxu0 0.0
    %924 = vmatprep.subr.mxu0 0.0
    %925 = vmatpush2.msra.mxu0 0.0
    %926 = vmatprep.subr.mxu0 0.0
    %927 = vmatpush2.msra.mxu0 0.0
    %928 = vmatprep.subr.mxu0 0.0
    %929 = vmatpush2.msra.mxu0 0.0
    %930 = vmatprep.subr.mxu0 0.0
    %931 = vmatpush2.msra.mxu0 0.0
    %932 = vmatprep.subr.mxu0 0.0
    %933 = vmatpush2.msra.mxu0 0.0
    %934 = vmatprep.mubr.f32.mxu0 0.0
    %935 = vmatmul.mubr.f32.gmra.mxu0 %v790
    %v936 = vpop.f32.mrf.mxu0
    %v937 = vadd.f32 0.0, %v936
    %v938 = vpop.f32.mrf.mxu0
    %939 = vdwg.mxu0
    %v940 = vadd.f32 %v796, %v866
    %v941 = vxor.u32 %v940, 2147483648
    %v942 = vmul.f32 %v941, 1.442695
    %v943 = vpow.pop %v942
    %v944 = vadd.f32 %v943, 1.0
    %v945 = vrcp.pop %v944
    %v946 = vmul.f32 1.0, %v945
    %v947 = vadd.f32 %v797, %v868
    %v948 = vxor.u32 %v947, 2147483648
    %v949 = vmul.f32 %v948, 1.442695
    %v950 = vpow.pop %v949
    %v951 = vadd.f32 %v950, 1.0
    %v952 = vrcp.pop %v951
    %v953 = vmul.f32 1.0, %v952
    %v954 = vadd.f32 %v937, %v611
    %v955 = vmul.f32 %v946, %v954
    %v956 = vadd.f32 %v798, %v955
    %v957 = vtanh.pop %v956
    %v958 = vsub.f32 1.0, %v953
    %v959 = vmul.f32 %v958, %v957
    %v960 = vmul.f32 %v953, %v790
    %v961 = vadd.f32 %v959, %v960
    %s962 = scalar_lea.vmem [#allocation3], 16
    %963 = vst [vmem:[%s962] sm:$0xff] %v961
    %s964 = smul.u32 3, 3
    %s965 = smul.addr %s964, 8
    %s966 = scalar_lea.vmem [#allocation2], %s965
    %v967 = vld [vmem:[%s966] sm:$0xff]
    %v968 = vld [vmem:[%s966 + $0x8] sm:$0xff]
    %v969 = vld [vmem:[%s966 + $0x10] sm:$0xff]
    %970 = vmatprep.subr.mxu0 %v443
    %971 = vmatpush1.msra.mxu0 %v442
    %972 = vmatprep.subr.mxu0 %v440
    %973 = vmatpush1.msra.mxu0 %v439
    %974 = vmatprep.subr.mxu0 %v437
    %975 = vmatpush1.msra.mxu0 %v436
    %976 = vmatprep.subr.mxu0 %v434
    %977 = vmatpush1.msra.mxu0 %v433
    %978 = vmatprep.subr.mxu0 %v431
    %979 = vmatpush1.msra.mxu0 %v430
    %980 = vmatprep.subr.mxu0 %v428
    %981 = vmatpush1.msra.mxu0 %v427
    %982 = vmatprep.subr.mxu0 %v425
    %983 = vmatpush1.msra.mxu0 %v424
    %984 = vmatprep.subr.mxu0 %v422
    %985 = vmatpush1.msra.mxu0 %v421
    %986 = vmatprep.subr.mxu0 %v419
    %987 = vmatpush1.msra.mxu0 %v418
    %988 = vmatprep.subr.mxu0 %v416
    %989 = vmatpush1.msra.mxu0 %v415
    %990 = vmatprep.subr.mxu0 %v413
    %991 = vmatpush1.msra.mxu0 %v412
    %992 = vmatprep.subr.mxu0 %v410
    %993 = vmatpush1.msra.mxu0 %v409
    %994 = vmatprep.subr.mxu0 %v407
    %995 = vmatpush1.msra.mxu0 %v406
    %996 = vmatprep.subr.mxu0 %v404
    %997 = vmatpush1.msra.mxu0 %v403
    %998 = vmatprep.subr.mxu0 %v401
    %999 = vmatpush1.msra.mxu0 %v400
    %1000 = vmatprep.subr.mxu0 %v398
    %1001 = vmatpush1.msra.mxu0 %v397
    %1002 = vmatprep.subr.mxu0 0.0
    %1003 = vmatpush2.msra.mxu0 0.0
    %1004 = vmatprep.subr.mxu0 0.0
    %1005 = vmatpush2.msra.mxu0 0.0
    %1006 = vmatprep.subr.mxu0 0.0
    %1007 = vmatpush2.msra.mxu0 0.0
    %1008 = vmatprep.subr.mxu0 0.0
    %1009 = vmatpush2.msra.mxu0 0.0
    %1010 = vmatprep.subr.mxu0 0.0
    %1011 = vmatpush2.msra.mxu0 0.0
    %1012 = vmatprep.subr.mxu0 0.0
    %1013 = vmatpush2.msra.mxu0 0.0
    %1014 = vmatprep.subr.mxu0 0.0
    %1015 = vmatpush2.msra.mxu0 0.0
    %1016 = vmatprep.subr.mxu0 0.0
    %1017 = vmatpush2.msra.mxu0 0.0
    %1018 = vmatprep.subr.mxu0 0.0
    %1019 = vmatpush2.msra.mxu0 0.0
    %1020 = vmatprep.subr.mxu0 0.0
    %1021 = vmatpush2.msra.mxu0 0.0
    %1022 = vmatprep.subr.mxu0 0.0
    %1023 = vmatpush2.msra.mxu0 0.0
    %1024 = vmatprep.subr.mxu0 0.0
    %1025 = vmatpush2.msra.mxu0 0.0
    %1026 = vmatprep.subr.mxu0 0.0
    %1027 = vmatpush2.msra.mxu0 0.0
    %1028 = vmatprep.subr.mxu0 0.0
    %1029 = vmatpush2.msra.mxu0 0.0
    %1030 = vmatprep.subr.mxu0 0.0
    %1031 = vmatpush2.msra.mxu0 0.0
    %1032 = vmatprep.subr.mxu0 0.0
    %1033 = vmatpush2.msra.mxu0 0.0
    %1034 = vmatprep.mubr.f32.mxu0 0.0
    %1035 = vmatmul.mubr.f32.gmra.mxu0 %v961
    %v1036 = vpop.f32.mrf.mxu0
    %v1037 = vadd.f32 0.0, %v1036
    %v1038 = vpop.f32.mrf.mxu0
    %v1039 = vadd.f32 0.0, %v1038
    %1040 = vdwg.mxu0
    %1041 = vmatprep.subr.mxu0 0.0
    %1042 = vmatpush1.msra.mxu0 %v444
    %1043 = vmatprep.subr.mxu0 0.0
    %1044 = vmatpush1.msra.mxu0 %v441
    %1045 = vmatprep.subr.mxu0 0.0
    %1046 = vmatpush1.msra.mxu0 %v438
    %1047 = vmatprep.subr.mxu0 0.0
    %1048 = vmatpush1.msra.mxu0 %v435
    %1049 = vmatprep.subr.mxu0 0.0
    %1050 = vmatpush1.msra.mxu0 %v432
    %1051 = vmatprep.subr.mxu0 0.0
    %1052 = vmatpush1.msra.mxu0 %v429
    %1053 = vmatprep.subr.mxu0 0.0
    %1054 = vmatpush1.msra.mxu0 %v426
    %1055 = vmatprep.subr.mxu0 0.0
    %1056 = vmatpush1.msra.mxu0 %v423
    %1057 = vmatprep.subr.mxu0 0.0
    %1058 = vmatpush1.msra.mxu0 %v420
    %1059 = vmatprep.subr.mxu0 0.0
    %1060 = vmatpush1.msra.mxu0 %v417
    %1061 = vmatprep.subr.mxu0 0.0
    %1062 = vmatpush1.msra.mxu0 %v414
    %1063 = vmatprep.subr.mxu0 0.0
    %1064 = vmatpush1.msra.mxu0 %v411
    %1065 = vmatprep.subr.mxu0 0.0
    %1066 = vmatpush1.msra.mxu0 %v408
    %1067 = vmatprep.subr.mxu0 0.0
    %1068 = vmatpush1.msra.mxu0 %v405
    %1069 = vmatprep.subr.mxu0 0.0
    %1070 = vmatpush1.msra.mxu0 %v402
    %1071 = vmatprep.subr.mxu0 0.0
    %1072 = vmatpush1.msra.mxu0 %v399
    %1073 = vmatprep.subr.mxu0 0.0
    %1074 = vmatpush2.msra.mxu0 0.0
    %1075 = vmatprep.subr.mxu0 0.0
    %1076 = vmatpush2.msra.mxu0 0.0
    %1077 = vmatprep.subr.mxu0 0.0
    %1078 = vmatpush2.msra.mxu0 0.0
    %1079 = vmatprep.subr.mxu0 0.0
    %1080 = vmatpush2.msra.mxu0 0.0
    %1081 = vmatprep.subr.mxu0 0.0
    %1082 = vmatpush2.msra.mxu0 0.0
    %1083 = vmatprep.subr.mxu0 0.0
    %1084 = vmatpush2.msra.mxu0 0.0
    %1085 = vmatprep.subr.mxu0 0.0
    %1086 = vmatpush2.msra.mxu0 0.0
    %1087 = vmatprep.subr.mxu0 0.0
    %1088 = vmatpush2.msra.mxu0 0.0
    %1089 = vmatprep.subr.mxu0 0.0
    %1090 = vmatpush2.msra.mxu0 0.0
    %1091 = vmatprep.subr.mxu0 0.0
    %1092 = vmatpush2.msra.mxu0 0.0
    %1093 = vmatprep.subr.mxu0 0.0
    %1094 = vmatpush2.msra.mxu0 0.0
    %1095 = vmatprep.subr.mxu0 0.0
    %1096 = vmatpush2.msra.mxu0 0.0
    %1097 = vmatprep.subr.mxu0 0.0
    %1098 = vmatpush2.msra.mxu0 0.0
    %1099 = vmatprep.subr.mxu0 0.0
    %1100 = vmatpush2.msra.mxu0 0.0
    %1101 = vmatprep.subr.mxu0 0.0
    %1102 = vmatpush2.msra.mxu0 0.0
    %1103 = vmatprep.subr.mxu0 0.0
    %1104 = vmatpush2.msra.mxu0 0.0
    %1105 = vmatprep.mubr.f32.mxu0 0.0
    %1106 = vmatmul.mubr.f32.gmra.mxu0 %v961
    %v1107 = vpop.f32.mrf.mxu0
    %v1108 = vadd.f32 0.0, %v1107
    %v1109 = vpop.f32.mrf.mxu0
    %1110 = vdwg.mxu0
    %v1111 = vadd.f32 %v967, %v1037
    %v1112 = vxor.u32 %v1111, 2147483648
    %v1113 = vmul.f32 %v1112, 1.442695
    %v1114 = vpow.pop %v1113
    %v1115 = vadd.f32 %v1114, 1.0
    %v1116 = vrcp.pop %v1115
    %v1117 = vmul.f32 1.0, %v1116
    %v1118 = vadd.f32 %v968, %v1039
    %v1119 = vxor.u32 %v1118, 2147483648
    %v1120 = vmul.f32 %v1119, 1.442695
    %v1121 = vpow.pop %v1120
    %v1122 = vadd.f32 %v1121, 1.0
    %v1123 = vrcp.pop %v1122
    %v1124 = vmul.f32 1.0, %v1123
    %v1125 = vadd.f32 %v1108, %v611
    %v1126 = vmul.f32 %v1117, %v1125
    %v1127 = vadd.f32 %v969, %v1126
    %v1128 = vtanh.pop %v1127
    %v1129 = vsub.f32 1.0, %v1124
    %v1130 = vmul.f32 %v1129, %v1128
    %v1131 = vmul.f32 %v1124, %v961
    %v1132 = vadd.f32 %v1130, %v1131
    %s1133 = scalar_lea.vmem [#allocation3], 24
    %1134 = vst [vmem:[%s1133] sm:$0xff] %v1132
    %s1135 = smul.u32 4, 3
    %s1136 = smul.addr %s1135, 8
    %s1137 = scalar_lea.vmem [#allocation2], %s1136
    %v1138 = vld [vmem:[%s1137] sm:$0xff]
    %v1139 = vld [vmem:[%s1137 + $0x8] sm:$0xff]
    %v1140 = vld [vmem:[%s1137 + $0x10] sm:$0xff]
    %1141 = vmatprep.subr.mxu0 %v443
    %1142 = vmatpush1.msra.mxu0 %v442
    %1143 = vmatprep.subr.mxu0 %v440
    %1144 = vmatpush1.msra.mxu0 %v439
    %1145 = vmatprep.subr.mxu0 %v437
    %1146 = vmatpush1.msra.mxu0 %v436
    %1147 = vmatprep.subr.mxu0 %v434
    %1148 = vmatpush1.msra.mxu0 %v433
    %1149 = vmatprep.subr.mxu0 %v431
    %1150 = vmatpush1.msra.mxu0 %v430
    %1151 = vmatprep.subr.mxu0 %v428
    %1152 = vmatpush1.msra.mxu0 %v427
    %1153 = vmatprep.subr.mxu0 %v425
    %1154 = vmatpush1.msra.mxu0 %v424
    %1155 = vmatprep.subr.mxu0 %v422
    %1156 = vmatpush1.msra.mxu0 %v421
    %1157 = vmatprep.subr.mxu0 %v419
    %1158 = vmatpush1.msra.mxu0 %v418
    %1159 = vmatprep.subr.mxu0 %v416
    %1160 = vmatpush1.msra.mxu0 %v415
    %1161 = vmatprep.subr.mxu0 %v413
    %1162 = vmatpush1.msra.mxu0 %v412
    %1163 = vmatprep.subr.mxu0 %v410
    %1164 = vmatpush1.msra.mxu0 %v409
    %1165 = vmatprep.subr.mxu0 %v407
    %1166 = vmatpush1.msra.mxu0 %v406
    %1167 = vmatprep.subr.mxu0 %v404
    %1168 = vmatpush1.msra.mxu0 %v403
    %1169 = vmatprep.subr.mxu0 %v401
    %1170 = vmatpush1.msra.mxu0 %v400
    %1171 = vmatprep.subr.mxu0 %v398
    %1172 = vmatpush1.msra.mxu0 %v397
    %1173 = vmatprep.subr.mxu0 0.0
    %1174 = vmatpush2.msra.mxu0 0.0
    %1175 = vmatprep.subr.mxu0 0.0
    %1176 = vmatpush2.msra.mxu0 0.0
    %1177 = vmatprep.subr.mxu0 0.0
    %1178 = vmatpush2.msra.mxu0 0.0
    %1179 = vmatprep.subr.mxu0 0.0
    %1180 = vmatpush2.msra.mxu0 0.0
    %1181 = vmatprep.subr.mxu0 0.0
    %1182 = vmatpush2.msra.mxu0 0.0
    %1183 = vmatprep.subr.mxu0 0.0
    %1184 = vmatpush2.msra.mxu0 0.0
    %1185 = vmatprep.subr.mxu0 0.0
    %1186 = vmatpush2.msra.mxu0 0.0
    %1187 = vmatprep.subr.mxu0 0.0
    %1188 = vmatpush2.msra.mxu0 0.0
    %1189 = vmatprep.subr.mxu0 0.0
    %1190 = vmatpush2.msra.mxu0 0.0
    %1191 = vmatprep.subr.mxu0 0.0
    %1192 = vmatpush2.msra.mxu0 0.0
    %1193 = vmatprep.subr.mxu0 0.0
    %1194 = vmatpush2.msra.mxu0 0.0
    %1195 = vmatprep.subr.mxu0 0.0
    %1196 = vmatpush2.msra.mxu0 0.0
    %1197 = vmatprep.subr.mxu0 0.0
    %1198 = vmatpush2.msra.mxu0 0.0
    %1199 = vmatprep.subr.mxu0 0.0
    %1200 = vmatpush2.msra.mxu0 0.0
    %1201 = vmatprep.subr.mxu0 0.0
    %1202 = vmatpush2.msra.mxu0 0.0
    %1203 = vmatprep.subr.mxu0 0.0
    %1204 = vmatpush2.msra.mxu0 0.0
    %1205 = vmatprep.mubr.f32.mxu0 0.0
    %1206 = vmatmul.mubr.f32.gmra.mxu0 %v1132
    %v1207 = vpop.f32.mrf.mxu0
    %v1208 = vadd.f32 0.0, %v1207
    %v1209 = vpop.f32.mrf.mxu0
    %v1210 = vadd.f32 0.0, %v1209
    %1211 = vdwg.mxu0
    %1212 = vmatprep.subr.mxu0 0.0
    %1213 = vmatpush1.msra.mxu0 %v444
    %1214 = vmatprep.subr.mxu0 0.0
    %1215 = vmatpush1.msra.mxu0 %v441
    %1216 = vmatprep.subr.mxu0 0.0
    %1217 = vmatpush1.msra.mxu0 %v438
    %1218 = vmatprep.subr.mxu0 0.0
    %1219 = vmatpush1.msra.mxu0 %v435
    %1220 = vmatprep.subr.mxu0 0.0
    %1221 = vmatpush1.msra.mxu0 %v432
    %1222 = vmatprep.subr.mxu0 0.0
    %1223 = vmatpush1.msra.mxu0 %v429
    %1224 = vmatprep.subr.mxu0 0.0
    %1225 = vmatpush1.msra.mxu0 %v426
    %1226 = vmatprep.subr.mxu0 0.0
    %1227 = vmatpush1.msra.mxu0 %v423
    %1228 = vmatprep.subr.mxu0 0.0
    %1229 = vmatpush1.msra.mxu0 %v420
    %1230 = vmatprep.subr.mxu0 0.0
    %1231 = vmatpush1.msra.mxu0 %v417
    %1232 = vmatprep.subr.mxu0 0.0
    %1233 = vmatpush1.msra.mxu0 %v414
    %1234 = vmatprep.subr.mxu0 0.0
    %1235 = vmatpush1.msra.mxu0 %v411
    %1236 = vmatprep.subr.mxu0 0.0
    %1237 = vmatpush1.msra.mxu0 %v408
    %1238 = vmatprep.subr.mxu0 0.0
    %1239 = vmatpush1.msra.mxu0 %v405
    %1240 = vmatprep.subr.mxu0 0.0
    %1241 = vmatpush1.msra.mxu0 %v402
    %1242 = vmatprep.subr.mxu0 0.0
    %1243 = vmatpush1.msra.mxu0 %v399
    %1244 = vmatprep.subr.mxu0 0.0
    %1245 = vmatpush2.msra.mxu0 0.0
    %1246 = vmatprep.subr.mxu0 0.0
    %1247 = vmatpush2.msra.mxu0 0.0
    %1248 = vmatprep.subr.mxu0 0.0
    %1249 = vmatpush2.msra.mxu0 0.0
    %1250 = vmatprep.subr.mxu0 0.0
    %1251 = vmatpush2.msra.mxu0 0.0
    %1252 = vmatprep.subr.mxu0 0.0
    %1253 = vmatpush2.msra.mxu0 0.0
    %1254 = vmatprep.subr.mxu0 0.0
    %1255 = vmatpush2.msra.mxu0 0.0
    %1256 = vmatprep.subr.mxu0 0.0
    %1257 = vmatpush2.msra.mxu0 0.0
    %1258 = vmatprep.subr.mxu0 0.0
    %1259 = vmatpush2.msra.mxu0 0.0
    %1260 = vmatprep.subr.mxu0 0.0
    %1261 = vmatpush2.msra.mxu0 0.0
    %1262 = vmatprep.subr.mxu0 0.0
    %1263 = vmatpush2.msra.mxu0 0.0
    %1264 = vmatprep.subr.mxu0 0.0
    %1265 = vmatpush2.msra.mxu0 0.0
    %1266 = vmatprep.subr.mxu0 0.0
    %1267 = vmatpush2.msra.mxu0 0.0
    %1268 = vmatprep.subr.mxu0 0.0
    %1269 = vmatpush2.msra.mxu0 0.0
    %1270 = vmatprep.subr.mxu0 0.0
    %1271 = vmatpush2.msra.mxu0 0.0
    %1272 = vmatprep.subr.mxu0 0.0
    %1273 = vmatpush2.msra.mxu0 0.0
    %1274 = vmatprep.subr.mxu0 0.0
    %1275 = vmatpush2.msra.mxu0 0.0
    %1276 = vmatprep.mubr.f32.mxu0 0.0
    %1277 = vmatmul.mubr.f32.gmra.mxu0 %v1132
    %v1278 = vpop.f32.mrf.mxu0
    %v1279 = vadd.f32 0.0, %v1278
    %v1280 = vpop.f32.mrf.mxu0
    %1281 = vdwg.mxu0
    %v1282 = vadd.f32 %v1138, %v1208
    %v1283 = vxor.u32 %v1282, 2147483648
    %v1284 = vmul.f32 %v1283, 1.442695
    %v1285 = vpow.pop %v1284
    %v1286 = vadd.f32 %v1285, 1.0
    %v1287 = vrcp.pop %v1286
    %v1288 = vmul.f32 1.0, %v1287
    %v1289 = vadd.f32 %v1139, %v1210
    %v1290 = vxor.u32 %v1289, 2147483648
    %v1291 = vmul.f32 %v1290, 1.442695
    %v1292 = vpow.pop %v1291
    %v1293 = vadd.f32 %v1292, 1.0
    %v1294 = vrcp.pop %v1293
    %v1295 = vmul.f32 1.0, %v1294
    %v1296 = vadd.f32 %v1279, %v611
    %v1297 = vmul.f32 %v1288, %v1296
    %v1298 = vadd.f32 %v1140, %v1297
    %v1299 = vtanh.pop %v1298
    %v1300 = vsub.f32 1.0, %v1295
    %v1301 = vmul.f32 %v1300, %v1299
    %v1302 = vmul.f32 %v1295, %v1132
    %v1303 = vadd.f32 %v1301, %v1302
    %s1304 = scalar_lea.vmem [#allocation3], 32
    %1305 = vst [vmem:[%s1304] sm:$0xff] %v1303
    %s1306 = smul.u32 5, 3
    %s1307 = smul.addr %s1306, 8
    %s1308 = scalar_lea.vmem [#allocation2], %s1307
    %v1309 = vld [vmem:[%s1308] sm:$0xff]
    %v1310 = vld [vmem:[%s1308 + $0x8] sm:$0xff]
    %v1311 = vld [vmem:[%s1308 + $0x10] sm:$0xff]
    %1312 = vmatprep.subr.mxu0 %v443
    %1313 = vmatpush1.msra.mxu0 %v442
    %1314 = vmatprep.subr.mxu0 %v440
    %1315 = vmatpush1.msra.mxu0 %v439
    %1316 = vmatprep.subr.mxu0 %v437
    %1317 = vmatpush1.msra.mxu0 %v436
    %1318 = vmatprep.subr.mxu0 %v434
    %1319 = vmatpush1.msra.mxu0 %v433
    %1320 = vmatprep.subr.mxu0 %v431
    %1321 = vmatpush1.msra.mxu0 %v430
    %1322 = vmatprep.subr.mxu0 %v428
    %1323 = vmatpush1.msra.mxu0 %v427
    %1324 = vmatprep.subr.mxu0 %v425
    %1325 = vmatpush1.msra.mxu0 %v424
    %1326 = vmatprep.subr.mxu0 %v422
    %1327 = vmatpush1.msra.mxu0 %v421
    %1328 = vmatprep.subr.mxu0 %v419
    %1329 = vmatpush1.msra.mxu0 %v418
    %1330 = vmatprep.subr.mxu0 %v416
    %1331 = vmatpush1.msra.mxu0 %v415
    %1332 = vmatprep.subr.mxu0 %v413
    %1333 = vmatpush1.msra.mxu0 %v412
    %1334 = vmatprep.subr.mxu0 %v410
    %1335 = vmatpush1.msra.mxu0 %v409
    %1336 = vmatprep.subr.mxu0 %v407
    %1337 = vmatpush1.msra.mxu0 %v406
    %1338 = vmatprep.subr.mxu0 %v404
    %1339 = vmatpush1.msra.mxu0 %v403
    %1340 = vmatprep.subr.mxu0 %v401
    %1341 = vmatpush1.msra.mxu0 %v400
    %1342 = vmatprep.subr.mxu0 %v398
    %1343 = vmatpush1.msra.mxu0 %v397
    %1344 = vmatprep.subr.mxu0 0.0
    %1345 = vmatpush2.msra.mxu0 0.0
    %1346 = vmatprep.subr.mxu0 0.0
    %1347 = vmatpush2.msra.mxu0 0.0
    %1348 = vmatprep.subr.mxu0 0.0
    %1349 = vmatpush2.msra.mxu0 0.0
    %1350 = vmatprep.subr.mxu0 0.0
    %1351 = vmatpush2.msra.mxu0 0.0
    %1352 = vmatprep.subr.mxu0 0.0
    %1353 = vmatpush2.msra.mxu0 0.0
    %1354 = vmatprep.subr.mxu0 0.0
    %1355 = vmatpush2.msra.mxu0 0.0
    %1356 = vmatprep.subr.mxu0 0.0
    %1357 = vmatpush2.msra.mxu0 0.0
    %1358 = vmatprep.subr.mxu0 0.0
    %1359 = vmatpush2.msra.mxu0 0.0
    %1360 = vmatprep.subr.mxu0 0.0
    %1361 = vmatpush2.msra.mxu0 0.0
    %1362 = vmatprep.subr.mxu0 0.0
    %1363 = vmatpush2.msra.mxu0 0.0
    %1364 = vmatprep.subr.mxu0 0.0
    %1365 = vmatpush2.msra.mxu0 0.0
    %1366 = vmatprep.subr.mxu0 0.0
    %1367 = vmatpush2.msra.mxu0 0.0
    %1368 = vmatprep.subr.mxu0 0.0
    %1369 = vmatpush2.msra.mxu0 0.0
    %1370 = vmatprep.subr.mxu0 0.0
    %1371 = vmatpush2.msra.mxu0 0.0
    %1372 = vmatprep.subr.mxu0 0.0
    %1373 = vmatpush2.msra.mxu0 0.0
    %1374 = vmatprep.subr.mxu0 0.0
    %1375 = vmatpush2.msra.mxu0 0.0
    %1376 = vmatprep.mubr.f32.mxu0 0.0
    %1377 = vmatmul.mubr.f32.gmra.mxu0 %v1303
    %v1378 = vpop.f32.mrf.mxu0
    %v1379 = vadd.f32 0.0, %v1378
    %v1380 = vpop.f32.mrf.mxu0
    %v1381 = vadd.f32 0.0, %v1380
    %1382 = vdwg.mxu0
    %1383 = vmatprep.subr.mxu0 0.0
    %1384 = vmatpush1.msra.mxu0 %v444
    %1385 = vmatprep.subr.mxu0 0.0
    %1386 = vmatpush1.msra.mxu0 %v441
    %1387 = vmatprep.subr.mxu0 0.0
    %1388 = vmatpush1.msra.mxu0 %v438
    %1389 = vmatprep.subr.mxu0 0.0
    %1390 = vmatpush1.msra.mxu0 %v435
    %1391 = vmatprep.subr.mxu0 0.0
    %1392 = vmatpush1.msra.mxu0 %v432
    %1393 = vmatprep.subr.mxu0 0.0
    %1394 = vmatpush1.msra.mxu0 %v429
    %1395 = vmatprep.subr.mxu0 0.0
    %1396 = vmatpush1.msra.mxu0 %v426
    %1397 = vmatprep.subr.mxu0 0.0
    %1398 = vmatpush1.msra.mxu0 %v423
    %1399 = vmatprep.subr.mxu0 0.0
    %1400 = vmatpush1.msra.mxu0 %v420
    %1401 = vmatprep.subr.mxu0 0.0
    %1402 = vmatpush1.msra.mxu0 %v417
    %1403 = vmatprep.subr.mxu0 0.0
    %1404 = vmatpush1.msra.mxu0 %v414
    %1405 = vmatprep.subr.mxu0 0.0
    %1406 = vmatpush1.msra.mxu0 %v411
    %1407 = vmatprep.subr.mxu0 0.0
    %1408 = vmatpush1.msra.mxu0 %v408
    %1409 = vmatprep.subr.mxu0 0.0
    %1410 = vmatpush1.msra.mxu0 %v405
    %1411 = vmatprep.subr.mxu0 0.0
    %1412 = vmatpush1.msra.mxu0 %v402
    %1413 = vmatprep.subr.mxu0 0.0
    %1414 = vmatpush1.msra.mxu0 %v399
    %1415 = vmatprep.subr.mxu0 0.0
    %1416 = vmatpush2.msra.mxu0 0.0
    %1417 = vmatprep.subr.mxu0 0.0
    %1418 = vmatpush2.msra.mxu0 0.0
    %1419 = vmatprep.subr.mxu0 0.0
    %1420 = vmatpush2.msra.mxu0 0.0
    %1421 = vmatprep.subr.mxu0 0.0
    %1422 = vmatpush2.msra.mxu0 0.0
    %1423 = vmatprep.subr.mxu0 0.0
    %1424 = vmatpush2.msra.mxu0 0.0
    %1425 = vmatprep.subr.mxu0 0.0
    %1426 = vmatpush2.msra.mxu0 0.0
    %1427 = vmatprep.subr.mxu0 0.0
    %1428 = vmatpush2.msra.mxu0 0.0
    %1429 = vmatprep.subr.mxu0 0.0
    %1430 = vmatpush2.msra.mxu0 0.0
    %1431 = vmatprep.subr.mxu0 0.0
    %1432 = vmatpush2.msra.mxu0 0.0
    %1433 = vmatprep.subr.mxu0 0.0
    %1434 = vmatpush2.msra.mxu0 0.0
    %1435 = vmatprep.subr.mxu0 0.0
    %1436 = vmatpush2.msra.mxu0 0.0
    %1437 = vmatprep.subr.mxu0 0.0
    %1438 = vmatpush2.msra.mxu0 0.0
    %1439 = vmatprep.subr.mxu0 0.0
    %1440 = vmatpush2.msra.mxu0 0.0
    %1441 = vmatprep.subr.mxu0 0.0
    %1442 = vmatpush2.msra.mxu0 0.0
    %1443 = vmatprep.subr.mxu0 0.0
    %1444 = vmatpush2.msra.mxu0 0.0
    %1445 = vmatprep.subr.mxu0 0.0
    %1446 = vmatpush2.msra.mxu0 0.0
    %1447 = vmatprep.mubr.f32.mxu0 0.0
    %1448 = vmatmul.mubr.f32.gmra.mxu0 %v1303
    %v1449 = vpop.f32.mrf.mxu0
    %v1450 = vadd.f32 0.0, %v1449
    %v1451 = vpop.f32.mrf.mxu0
    %1452 = vdwg.mxu0
    %v1453 = vadd.f32 %v1309, %v1379
    %v1454 = vxor.u32 %v1453, 2147483648
    %v1455 = vmul.f32 %v1454, 1.442695
    %v1456 = vpow.pop %v1455
    %v1457 = vadd.f32 %v1456, 1.0
    %v1458 = vrcp.pop %v1457
    %v1459 = vmul.f32 1.0, %v1458
    %v1460 = vadd.f32 %v1310, %v1381
    %v1461 = vxor.u32 %v1460, 2147483648
    %v1462 = vmul.f32 %v1461, 1.442695
    %v1463 = vpow.pop %v1462
    %v1464 = vadd.f32 %v1463, 1.0
    %v1465 = vrcp.pop %v1464
    %v1466 = vmul.f32 1.0, %v1465
    %v1467 = vadd.f32 %v1450, %v611
    %v1468 = vmul.f32 %v1459, %v1467
    %v1469 = vadd.f32 %v1311, %v1468
    %v1470 = vtanh.pop %v1469
    %v1471 = vsub.f32 1.0, %v1466
    %v1472 = vmul.f32 %v1471, %v1470
    %v1473 = vmul.f32 %v1466, %v1303
    %v1474 = vadd.f32 %v1472, %v1473
    %s1475 = scalar_lea.vmem [#allocation3], 40
    %1476 = vst [vmem:[%s1475] sm:$0xff] %v1474
    %s1477 = smul.u32 6, 3
    %s1478 = smul.addr %s1477, 8
    %s1479 = scalar_lea.vmem [#allocation2], %s1478
    %v1480 = vld [vmem:[%s1479] sm:$0xff]
    %v1481 = vld [vmem:[%s1479 + $0x8] sm:$0xff]
    %v1482 = vld [vmem:[%s1479 + $0x10] sm:$0xff]
    %1483 = vmatprep.subr.mxu0 %v443
    %1484 = vmatpush1.msra.mxu0 %v442
    %1485 = vmatprep.subr.mxu0 %v440
    %1486 = vmatpush1.msra.mxu0 %v439
    %1487 = vmatprep.subr.mxu0 %v437
    %1488 = vmatpush1.msra.mxu0 %v436
    %1489 = vmatprep.subr.mxu0 %v434
    %1490 = vmatpush1.msra.mxu0 %v433
    %1491 = vmatprep.subr.mxu0 %v431
    %1492 = vmatpush1.msra.mxu0 %v430
    %1493 = vmatprep.subr.mxu0 %v428
    %1494 = vmatpush1.msra.mxu0 %v427
    %1495 = vmatprep.subr.mxu0 %v425
    %1496 = vmatpush1.msra.mxu0 %v424
    %1497 = vmatprep.subr.mxu0 %v422
    %1498 = vmatpush1.msra.mxu0 %v421
    %1499 = vmatprep.subr.mxu0 %v419
    %1500 = vmatpush1.msra.mxu0 %v418
    %1501 = vmatprep.subr.mxu0 %v416
    %1502 = vmatpush1.msra.mxu0 %v415
    %1503 = vmatprep.subr.mxu0 %v413
    %1504 = vmatpush1.msra.mxu0 %v412
    %1505 = vmatprep.subr.mxu0 %v410
    %1506 = vmatpush1.msra.mxu0 %v409
    %1507 = vmatprep.subr.mxu0 %v407
    %1508 = vmatpush1.msra.mxu0 %v406
    %1509 = vmatprep.subr.mxu0 %v404
    %1510 = vmatpush1.msra.mxu0 %v403
    %1511 = vmatprep.subr.mxu0 %v401
    %1512 = vmatpush1.msra.mxu0 %v400
    %1513 = vmatprep.subr.mxu0 %v398
    %1514 = vmatpush1.msra.mxu0 %v397
    %1515 = vmatprep.subr.mxu0 0.0
    %1516 = vmatpush2.msra.mxu0 0.0
    %1517 = vmatprep.subr.mxu0 0.0
    %1518 = vmatpush2.msra.mxu0 0.0
    %1519 = vmatprep.subr.mxu0 0.0
    %1520 = vmatpush2.msra.mxu0 0.0
    %1521 = vmatprep.subr.mxu0 0.0
    %1522 = vmatpush2.msra.mxu0 0.0
    %1523 = vmatprep.subr.mxu0 0.0
    %1524 = vmatpush2.msra.mxu0 0.0
    %1525 = vmatprep.subr.mxu0 0.0
    %1526 = vmatpush2.msra.mxu0 0.0
    %1527 = vmatprep.subr.mxu0 0.0
    %1528 = vmatpush2.msra.mxu0 0.0
    %1529 = vmatprep.subr.mxu0 0.0
    %1530 = vmatpush2.msra.mxu0 0.0
    %1531 = vmatprep.subr.mxu0 0.0
    %1532 = vmatpush2.msra.mxu0 0.0
    %1533 = vmatprep.subr.mxu0 0.0
    %1534 = vmatpush2.msra.mxu0 0.0
    %1535 = vmatprep.subr.mxu0 0.0
    %1536 = vmatpush2.msra.mxu0 0.0
    %1537 = vmatprep.subr.mxu0 0.0
    %1538 = vmatpush2.msra.mxu0 0.0
    %1539 = vmatprep.subr.mxu0 0.0
    %1540 = vmatpush2.msra.mxu0 0.0
    %1541 = vmatprep.subr.mxu0 0.0
    %1542 = vmatpush2.msra.mxu0 0.0
    %1543 = vmatprep.subr.mxu0 0.0
    %1544 = vmatpush2.msra.mxu0 0.0
    %1545 = vmatprep.subr.mxu0 0.0
    %1546 = vmatpush2.msra.mxu0 0.0
    %1547 = vmatprep.mubr.f32.mxu0 0.0
    %1548 = vmatmul.mubr.f32.gmra.mxu0 %v1474
    %v1549 = vpop.f32.mrf.mxu0
    %v1550 = vadd.f32 0.0, %v1549
    %v1551 = vpop.f32.mrf.mxu0
    %v1552 = vadd.f32 0.0, %v1551
    %1553 = vdwg.mxu0
    %1554 = vmatprep.subr.mxu0 0.0
    %1555 = vmatpush1.msra.mxu0 %v444
    %1556 = vmatprep.subr.mxu0 0.0
    %1557 = vmatpush1.msra.mxu0 %v441
    %1558 = vmatprep.subr.mxu0 0.0
    %1559 = vmatpush1.msra.mxu0 %v438
    %1560 = vmatprep.subr.mxu0 0.0
    %1561 = vmatpush1.msra.mxu0 %v435
    %1562 = vmatprep.subr.mxu0 0.0
    %1563 = vmatpush1.msra.mxu0 %v432
    %1564 = vmatprep.subr.mxu0 0.0
    %1565 = vmatpush1.msra.mxu0 %v429
    %1566 = vmatprep.subr.mxu0 0.0
    %1567 = vmatpush1.msra.mxu0 %v426
    %1568 = vmatprep.subr.mxu0 0.0
    %1569 = vmatpush1.msra.mxu0 %v423
    %1570 = vmatprep.subr.mxu0 0.0
    %1571 = vmatpush1.msra.mxu0 %v420
    %1572 = vmatprep.subr.mxu0 0.0
    %1573 = vmatpush1.msra.mxu0 %v417
    %1574 = vmatprep.subr.mxu0 0.0
    %1575 = vmatpush1.msra.mxu0 %v414
    %1576 = vmatprep.subr.mxu0 0.0
    %1577 = vmatpush1.msra.mxu0 %v411
    %1578 = vmatprep.subr.mxu0 0.0
    %1579 = vmatpush1.msra.mxu0 %v408
    %1580 = vmatprep.subr.mxu0 0.0
    %1581 = vmatpush1.msra.mxu0 %v405
    %1582 = vmatprep.subr.mxu0 0.0
    %1583 = vmatpush1.msra.mxu0 %v402
    %1584 = vmatprep.subr.mxu0 0.0
    %1585 = vmatpush1.msra.mxu0 %v399
    %1586 = vmatprep.subr.mxu0 0.0
    %1587 = vmatpush2.msra.mxu0 0.0
    %1588 = vmatprep.subr.mxu0 0.0
    %1589 = vmatpush2.msra.mxu0 0.0
    %1590 = vmatprep.subr.mxu0 0.0
    %1591 = vmatpush2.msra.mxu0 0.0
    %1592 = vmatprep.subr.mxu0 0.0
    %1593 = vmatpush2.msra.mxu0 0.0
    %1594 = vmatprep.subr.mxu0 0.0
    %1595 = vmatpush2.msra.mxu0 0.0
    %1596 = vmatprep.subr.mxu0 0.0
    %1597 = vmatpush2.msra.mxu0 0.0
    %1598 = vmatprep.subr.mxu0 0.0
    %1599 = vmatpush2.msra.mxu0 0.0
    %1600 = vmatprep.subr.mxu0 0.0
    %1601 = vmatpush2.msra.mxu0 0.0
    %1602 = vmatprep.subr.mxu0 0.0
    %1603 = vmatpush2.msra.mxu0 0.0
    %1604 = vmatprep.subr.mxu0 0.0
    %1605 = vmatpush2.msra.mxu0 0.0
    %1606 = vmatprep.subr.mxu0 0.0
    %1607 = vmatpush2.msra.mxu0 0.0
    %1608 = vmatprep.subr.mxu0 0.0
    %1609 = vmatpush2.msra.mxu0 0.0
    %1610 = vmatprep.subr.mxu0 0.0
    %1611 = vmatpush2.msra.mxu0 0.0
    %1612 = vmatprep.subr.mxu0 0.0
    %1613 = vmatpush2.msra.mxu0 0.0
    %1614 = vmatprep.subr.mxu0 0.0
    %1615 = vmatpush2.msra.mxu0 0.0
    %1616 = vmatprep.subr.mxu0 0.0
    %1617 = vmatpush2.msra.mxu0 0.0
    %1618 = vmatprep.mubr.f32.mxu0 0.0
    %1619 = vmatmul.mubr.f32.gmra.mxu0 %v1474
    %v1620 = vpop.f32.mrf.mxu0
    %v1621 = vadd.f32 0.0, %v1620
    %v1622 = vpop.f32.mrf.mxu0
    %1623 = vdwg.mxu0
    %v1624 = vadd.f32 %v1480, %v1550
    %v1625 = vxor.u32 %v1624, 2147483648
    %v1626 = vmul.f32 %v1625, 1.442695
    %v1627 = vpow.pop %v1626
    %v1628 = vadd.f32 %v1627, 1.0
    %v1629 = vrcp.pop %v1628
    %v1630 = vmul.f32 1.0, %v1629
    %v1631 = vadd.f32 %v1481, %v1552
    %v1632 = vxor.u32 %v1631, 2147483648
    %v1633 = vmul.f32 %v1632, 1.442695
    %v1634 = vpow.pop %v1633
    %v1635 = vadd.f32 %v1634, 1.0
    %v1636 = vrcp.pop %v1635
    %v1637 = vmul.f32 1.0, %v1636
    %v1638 = vadd.f32 %v1621, %v611
    %v1639 = vmul.f32 %v1630, %v1638
    %v1640 = vadd.f32 %v1482, %v1639
    %v1641 = vtanh.pop %v1640
    %v1642 = vsub.f32 1.0, %v1637
    %v1643 = vmul.f32 %v1642, %v1641
    %v1644 = vmul.f32 %v1637, %v1474
    %v1645 = vadd.f32 %v1643, %v1644
    %s1646 = scalar_lea.vmem [#allocation3], 48
    %1647 = vst [vmem:[%s1646] sm:$0xff] %v1645
    %s1648 = smul.u32 7, 3
    %s1649 = smul.addr %s1648, 8
    %s1650 = scalar_lea.vmem [#allocation2], %s1649
    %v1651 = vld [vmem:[%s1650] sm:$0xff]
    %v1652 = vld [vmem:[%s1650 + $0x8] sm:$0xff]
    %v1653 = vld [vmem:[%s1650 + $0x10] sm:$0xff]
    %1654 = vmatprep.subr.mxu0 %v443
    %1655 = vmatpush1.msra.mxu0 %v442
    %1656 = vmatprep.subr.mxu0 %v440
    %1657 = vmatpush1.msra.mxu0 %v439
    %1658 = vmatprep.subr.mxu0 %v437
    %1659 = vmatpush1.msra.mxu0 %v436
    %1660 = vmatprep.subr.mxu0 %v434
    %1661 = vmatpush1.msra.mxu0 %v433
    %1662 = vmatprep.subr.mxu0 %v431
    %1663 = vmatpush1.msra.mxu0 %v430
    %1664 = vmatprep.subr.mxu0 %v428
    %1665 = vmatpush1.msra.mxu0 %v427
    %1666 = vmatprep.subr.mxu0 %v425
    %1667 = vmatpush1.msra.mxu0 %v424
    %1668 = vmatprep.subr.mxu0 %v422
    %1669 = vmatpush1.msra.mxu0 %v421
    %1670 = vmatprep.subr.mxu0 %v419
    %1671 = vmatpush1.msra.mxu0 %v418
    %1672 = vmatprep.subr.mxu0 %v416
    %1673 = vmatpush1.msra.mxu0 %v415
    %1674 = vmatprep.subr.mxu0 %v413
    %1675 = vmatpush1.msra.mxu0 %v412
    %1676 = vmatprep.subr.mxu0 %v410
    %1677 = vmatpush1.msra.mxu0 %v409
    %1678 = vmatprep.subr.mxu0 %v407
    %1679 = vmatpush1.msra.mxu0 %v406
    %1680 = vmatprep.subr.mxu0 %v404
    %1681 = vmatpush1.msra.mxu0 %v403
    %1682 = vmatprep.subr.mxu0 %v401
    %1683 = vmatpush1.msra.mxu0 %v400
    %1684 = vmatprep.subr.mxu0 %v398
    %1685 = vmatpush1.msra.mxu0 %v397
    %1686 = vmatprep.subr.mxu0 0.0
    %1687 = vmatpush2.msra.mxu0 0.0
    %1688 = vmatprep.subr.mxu0 0.0
    %1689 = vmatpush2.msra.mxu0 0.0
    %1690 = vmatprep.subr.mxu0 0.0
    %1691 = vmatpush2.msra.mxu0 0.0
    %1692 = vmatprep.subr.mxu0 0.0
    %1693 = vmatpush2.msra.mxu0 0.0
    %1694 = vmatprep.subr.mxu0 0.0
    %1695 = vmatpush2.msra.mxu0 0.0
    %1696 = vmatprep.subr.mxu0 0.0
    %1697 = vmatpush2.msra.mxu0 0.0
    %1698 = vmatprep.subr.mxu0 0.0
    %1699 = vmatpush2.msra.mxu0 0.0
    %1700 = vmatprep.subr.mxu0 0.0
    %1701 = vmatpush2.msra.mxu0 0.0
    %1702 = vmatprep.subr.mxu0 0.0
    %1703 = vmatpush2.msra.mxu0 0.0
    %1704 = vmatprep.subr.mxu0 0.0
    %1705 = vmatpush2.msra.mxu0 0.0
    %1706 = vmatprep.subr.mxu0 0.0
    %1707 = vmatpush2.msra.mxu0 0.0
    %1708 = vmatprep.subr.mxu0 0.0
    %1709 = vmatpush2.msra.mxu0 0.0
    %1710 = vmatprep.subr.mxu0 0.0
    %1711 = vmatpush2.msra.mxu0 0.0
    %1712 = vmatprep.subr.mxu0 0.0
    %1713 = vmatpush2.msra.mxu0 0.0
    %1714 = vmatprep.subr.mxu0 0.0
    %1715 = vmatpush2.msra.mxu0 0.0
    %1716 = vmatprep.subr.mxu0 0.0
    %1717 = vmatpush2.msra.mxu0 0.0
    %1718 = vmatprep.mubr.f32.mxu0 0.0
    %1719 = vmatmul.mubr.f32.gmra.mxu0 %v1645
    %v1720 = vpop.f32.mrf.mxu0
    %v1721 = vadd.f32 0.0, %v1720
    %v1722 = vpop.f32.mrf.mxu0
    %v1723 = vadd.f32 0.0, %v1722
    %1724 = vdwg.mxu0
    %1725 = vmatprep.subr.mxu0 0.0
    %1726 = vmatpush1.msra.mxu0 %v444
    %1727 = vmatprep.subr.mxu0 0.0
    %1728 = vmatpush1.msra.mxu0 %v441
    %1729 = vmatprep.subr.mxu0 0.0
    %1730 = vmatpush1.msra.mxu0 %v438
    %1731 = vmatprep.subr.mxu0 0.0
    %1732 = vmatpush1.msra.mxu0 %v435
    %1733 = vmatprep.subr.mxu0 0.0
    %1734 = vmatpush1.msra.mxu0 %v432
    %1735 = vmatprep.subr.mxu0 0.0
    %1736 = vmatpush1.msra.mxu0 %v429
    %1737 = vmatprep.subr.mxu0 0.0
    %1738 = vmatpush1.msra.mxu0 %v426
    %1739 = vmatprep.subr.mxu0 0.0
    %1740 = vmatpush1.msra.mxu0 %v423
    %1741 = vmatprep.subr.mxu0 0.0
    %1742 = vmatpush1.msra.mxu0 %v420
    %1743 = vmatprep.subr.mxu0 0.0
    %1744 = vmatpush1.msra.mxu0 %v417
    %1745 = vmatprep.subr.mxu0 0.0
    %1746 = vmatpush1.msra.mxu0 %v414
    %1747 = vmatprep.subr.mxu0 0.0
    %1748 = vmatpush1.msra.mxu0 %v411
    %1749 = vmatprep.subr.mxu0 0.0
    %1750 = vmatpush1.msra.mxu0 %v408
    %1751 = vmatprep.subr.mxu0 0.0
    %1752 = vmatpush1.msra.mxu0 %v405
    %1753 = vmatprep.subr.mxu0 0.0
    %1754 = vmatpush1.msra.mxu0 %v402
    %1755 = vmatprep.subr.mxu0 0.0
    %1756 = vmatpush1.msra.mxu0 %v399
    %1757 = vmatprep.subr.mxu0 0.0
    %1758 = vmatpush2.msra.mxu0 0.0
    %1759 = vmatprep.subr.mxu0 0.0
    %1760 = vmatpush2.msra.mxu0 0.0
    %1761 = vmatprep.subr.mxu0 0.0
    %1762 = vmatpush2.msra.mxu0 0.0
    %1763 = vmatprep.subr.mxu0 0.0
    %1764 = vmatpush2.msra.mxu0 0.0
    %1765 = vmatprep.subr.mxu0 0.0
    %1766 = vmatpush2.msra.mxu0 0.0
    %1767 = vmatprep.subr.mxu0 0.0
    %1768 = vmatpush2.msra.mxu0 0.0
    %1769 = vmatprep.subr.mxu0 0.0
    %1770 = vmatpush2.msra.mxu0 0.0
    %1771 = vmatprep.subr.mxu0 0.0
    %1772 = vmatpush2.msra.mxu0 0.0
    %1773 = vmatprep.subr.mxu0 0.0
    %1774 = vmatpush2.msra.mxu0 0.0
    %1775 = vmatprep.subr.mxu0 0.0
    %1776 = vmatpush2.msra.mxu0 0.0
    %1777 = vmatprep.subr.mxu0 0.0
    %1778 = vmatpush2.msra.mxu0 0.0
    %1779 = vmatprep.subr.mxu0 0.0
    %1780 = vmatpush2.msra.mxu0 0.0
    %1781 = vmatprep.subr.mxu0 0.0
    %1782 = vmatpush2.msra.mxu0 0.0
    %1783 = vmatprep.subr.mxu0 0.0
    %1784 = vmatpush2.msra.mxu0 0.0
    %1785 = vmatprep.subr.mxu0 0.0
    %1786 = vmatpush2.msra.mxu0 0.0
    %1787 = vmatprep.subr.mxu0 0.0
    %1788 = vmatpush2.msra.mxu0 0.0
    %1789 = vmatprep.mubr.f32.mxu0 0.0
    %1790 = vmatmul.mubr.f32.gmra.mxu0 %v1645
    %v1791 = vpop.f32.mrf.mxu0
    %v1792 = vadd.f32 0.0, %v1791
    %v1793 = vpop.f32.mrf.mxu0
    %1794 = vdwg.mxu0
    %v1795 = vadd.f32 %v1651, %v1721
    %v1796 = vxor.u32 %v1795, 2147483648
    %v1797 = vmul.f32 %v1796, 1.442695
    %v1798 = vpow.pop %v1797
    %v1799 = vadd.f32 %v1798, 1.0
    %v1800 = vrcp.pop %v1799
    %v1801 = vmul.f32 1.0, %v1800
    %v1802 = vadd.f32 %v1652, %v1723
    %v1803 = vxor.u32 %v1802, 2147483648
    %v1804 = vmul.f32 %v1803, 1.442695
    %v1805 = vpow.pop %v1804
    %v1806 = vadd.f32 %v1805, 1.0
    %v1807 = vrcp.pop %v1806
    %v1808 = vmul.f32 1.0, %v1807
    %v1809 = vadd.f32 %v1792, %v611
    %v1810 = vmul.f32 %v1801, %v1809
    %v1811 = vadd.f32 %v1653, %v1810
    %v1812 = vtanh.pop %v1811
    %v1813 = vsub.f32 1.0, %v1808
    %v1814 = vmul.f32 %v1813, %v1812
    %v1815 = vmul.f32 %v1808, %v1645
    %v1816 = vadd.f32 %v1814, %v1815
    %s1817 = scalar_lea.vmem [#allocation3], 56
    %1818 = vst [vmem:[%s1817] sm:$0xff] %v1816
    %v1819 = vld [vmem:[#allocation3] sm:$0xff]
    %v1820 = vld [vmem:[#allocation3 + $0x8] sm:$0xff]
    %v1821 = vld [vmem:[#allocation3 + $0x10] sm:$0xff]
    %v1822 = vld [vmem:[#allocation3 + $0x18] sm:$0xff]
    %v1823 = vld [vmem:[#allocation3 + $0x20] sm:$0xff]
    %v1824 = vld [vmem:[#allocation3 + $0x28] sm:$0xff]
    %v1825 = vld [vmem:[#allocation3 + $0x30] sm:$0xff]
    %v1826 = vld [vmem:[#allocation3 + $0x38] sm:$0xff]
    %v1827 = vld [vmem:[#allocation10] sm:$0xff]
    %v1828 = vld [vmem:[#allocation10 + $0x8] sm:$0xff]
    %v1829 = vld [vmem:[#allocation10 + $0x10] sm:$0xff]
    %v1830 = vld [vmem:[#allocation10 + $0x18] sm:$0xff]
    %v1831 = vld [vmem:[#allocation10 + $0x20] sm:$0xff]
    %v1832 = vld [vmem:[#allocation10 + $0x28] sm:$0xff]
    %v1833 = vld [vmem:[#allocation10 + $0x30] sm:$0xff]
    %v1834 = vld [vmem:[#allocation10 + $0x38] sm:$0xff]
    %v1835 = vld [vmem:[#allocation10 + $0x40] sm:$0xff]
    %v1836 = vld [vmem:[#allocation10 + $0x48] sm:$0xff]
    %v1837 = vld [vmem:[#allocation10 + $0x50] sm:$0xff]
    %v1838 = vld [vmem:[#allocation10 + $0x58] sm:$0xff]
    %v1839 = vld [vmem:[#allocation10 + $0x60] sm:$0xff]
    %v1840 = vld [vmem:[#allocation10 + $0x68] sm:$0xff]
    %v1841 = vld [vmem:[#allocation10 + $0x70] sm:$0xff]
    %v1842 = vld [vmem:[#allocation10 + $0x78] sm:$0xff]
    %v1843 = vld [vmem:[#allocation10 + $0x80] sm:$0xff]
    %v1844 = vld [vmem:[#allocation10 + $0x88] sm:$0xff]
    %v1845 = vld [vmem:[#allocation10 + $0x90] sm:$0xff]
    %v1846 = vld [vmem:[#allocation10 + $0x98] sm:$0xff]
    %v1847 = vld [vmem:[#allocation10 + $0xa0] sm:$0xff]
    %v1848 = vld [vmem:[#allocation10 + $0xa8] sm:$0xff]
    %v1849 = vld [vmem:[#allocation10 + $0xb0] sm:$0xff]
    %v1850 = vld [vmem:[#allocation10 + $0xb8] sm:$0xff]
    %v1851 = vld [vmem:[#allocation10 + $0xc0] sm:$0xff]
    %v1852 = vld [vmem:[#allocation10 + $0xc8] sm:$0xff]
    %v1853 = vld [vmem:[#allocation10 + $0xd0] sm:$0xff]
    %v1854 = vld [vmem:[#allocation10 + $0xd8] sm:$0xff]
    %v1855 = vld [vmem:[#allocation10 + $0xe0] sm:$0xff]
    %v1856 = vld [vmem:[#allocation10 + $0xe8] sm:$0xff]
    %v1857 = vld [vmem:[#allocation10 + $0xf0] sm:$0xff]
    %v1858 = vld [vmem:[#allocation10 + $0xf8] sm:$0xff]
    %v1859 = vld [vmem:[#allocation10 + $0x100] sm:$0xff]
    %v1860 = vld [vmem:[#allocation10 + $0x108] sm:$0xff]
    %v1861 = vld [vmem:[#allocation10 + $0x110] sm:$0xff]
    %v1862 = vld [vmem:[#allocation10 + $0x118] sm:$0xff]
    %v1863 = vld [vmem:[#allocation10 + $0x120] sm:$0xff]
    %v1864 = vld [vmem:[#allocation10 + $0x128] sm:$0xff]
    %v1865 = vld [vmem:[#allocation10 + $0x130] sm:$0xff]
    %v1866 = vld [vmem:[#allocation10 + $0x138] sm:$0xff]
    %v1867 = vld [vmem:[#allocation10 + $0x140] sm:$0xff]
    %v1868 = vld [vmem:[#allocation10 + $0x148] sm:$0xff]
    %v1869 = vld [vmem:[#allocation10 + $0x150] sm:$0xff]
    %v1870 = vld [vmem:[#allocation10 + $0x158] sm:$0xff]
    %v1871 = vld [vmem:[#allocation10 + $0x160] sm:$0xff]
    %v1872 = vld [vmem:[#allocation10 + $0x168] sm:$0xff]
    %v1873 = vld [vmem:[#allocation10 + $0x170] sm:$0xff]
    %v1874 = vld [vmem:[#allocation10 + $0x178] sm:$0xff]
    %v1875 = vld [vmem:[#allocation10 + $0x180] sm:$0xff]
    %v1876 = vld [vmem:[#allocation10 + $0x188] sm:$0xff]
    %v1877 = vld [vmem:[#allocation10 + $0x190] sm:$0xff]
    %v1878 = vld [vmem:[#allocation10 + $0x198] sm:$0xff]
    %v1879 = vld [vmem:[#allocation10 + $0x1a0] sm:$0xff]
    %v1880 = vld [vmem:[#allocation10 + $0x1a8] sm:$0xff]
    %v1881 = vld [vmem:[#allocation10 + $0x1b0] sm:$0xff]
    %v1882 = vld [vmem:[#allocation10 + $0x1b8] sm:$0xff]
    %v1883 = vld [vmem:[#allocation10 + $0x1c0] sm:$0xff]
    %v1884 = vld [vmem:[#allocation10 + $0x1c8] sm:$0xff]
    %v1885 = vld [vmem:[#allocation10 + $0x1d0] sm:$0xff]
    %v1886 = vld [vmem:[#allocation10 + $0x1d8] sm:$0xff]
    %v1887 = vld [vmem:[#allocation10 + $0x1e0] sm:$0xff]
    %v1888 = vld [vmem:[#allocation10 + $0x1e8] sm:$0xff]
    %v1889 = vld [vmem:[#allocation10 + $0x1f0] sm:$0xff]
    %v1890 = vld [vmem:[#allocation10 + $0x1f8] sm:$0xff]
    %v1891 = vld [vmem:[#allocation10 + $0x200] sm:$0xff]
    %v1892 = vld [vmem:[#allocation10 + $0x208] sm:$0xff]
    %v1893 = vld [vmem:[#allocation10 + $0x210] sm:$0xff]
    %v1894 = vld [vmem:[#allocation10 + $0x218] sm:$0xff]
    %v1895 = vld [vmem:[#allocation10 + $0x220] sm:$0xff]
    %v1896 = vld [vmem:[#allocation10 + $0x228] sm:$0xff]
    %v1897 = vld [vmem:[#allocation10 + $0x230] sm:$0xff]
    %v1898 = vld [vmem:[#allocation10 + $0x238] sm:$0xff]
    %v1899 = vld [vmem:[#allocation10 + $0x240] sm:$0xff]
    %v1900 = vld [vmem:[#allocation10 + $0x248] sm:$0xff]
    %v1901 = vld [vmem:[#allocation10 + $0x250] sm:$0xff]
    %v1902 = vld [vmem:[#allocation10 + $0x258] sm:$0xff]
    %v1903 = vld [vmem:[#allocation10 + $0x260] sm:$0xff]
    %v1904 = vld [vmem:[#allocation10 + $0x268] sm:$0xff]
    %v1905 = vld [vmem:[#allocation10 + $0x270] sm:$0xff]
    %v1906 = vld [vmem:[#allocation10 + $0x278] sm:$0xff]
    %v1907 = vld [vmem:[#allocation10 + $0x280] sm:$0xff]
    %v1908 = vld [vmem:[#allocation10 + $0x288] sm:$0xff]
    %v1909 = vld [vmem:[#allocation10 + $0x290] sm:$0xff]
    %v1910 = vld [vmem:[#allocation10 + $0x298] sm:$0xff]
    %v1911 = vld [vmem:[#allocation10 + $0x2a0] sm:$0xff]
    %v1912 = vld [vmem:[#allocation10 + $0x2a8] sm:$0xff]
    %v1913 = vld [vmem:[#allocation10 + $0x2b0] sm:$0xff]
    %v1914 = vld [vmem:[#allocation10 + $0x2b8] sm:$0xff]
    %v1915 = vld [vmem:[#allocation10 + $0x2c0] sm:$0xff]
    %v1916 = vld [vmem:[#allocation10 + $0x2c8] sm:$0xff]
    %v1917 = vld [vmem:[#allocation10 + $0x2d0] sm:$0xff]
    %v1918 = vld [vmem:[#allocation10 + $0x2d8] sm:$0xff]
    %v1919 = vld [vmem:[#allocation10 + $0x2e0] sm:$0xff]
    %v1920 = vld [vmem:[#allocation10 + $0x2e8] sm:$0xff]
    %v1921 = vld [vmem:[#allocation10 + $0x2f0] sm:$0xff]
    %v1922 = vld [vmem:[#allocation10 + $0x2f8] sm:$0xff]
    %v1923 = vld [vmem:[#allocation10 + $0x300] sm:$0xff]
    %v1924 = vld [vmem:[#allocation10 + $0x308] sm:$0xff]
    %v1925 = vld [vmem:[#allocation10 + $0x310] sm:$0xff]
    %v1926 = vld [vmem:[#allocation10 + $0x318] sm:$0xff]
    %v1927 = vld [vmem:[#allocation10 + $0x320] sm:$0xff]
    %v1928 = vld [vmem:[#allocation10 + $0x328] sm:$0xff]
    %v1929 = vld [vmem:[#allocation10 + $0x330] sm:$0xff]
    %v1930 = vld [vmem:[#allocation10 + $0x338] sm:$0xff]
    %v1931 = vld [vmem:[#allocation10 + $0x340] sm:$0xff]
    %v1932 = vld [vmem:[#allocation10 + $0x348] sm:$0xff]
    %v1933 = vld [vmem:[#allocation10 + $0x350] sm:$0xff]
    %v1934 = vld [vmem:[#allocation10 + $0x358] sm:$0xff]
    %v1935 = vld [vmem:[#allocation10 + $0x360] sm:$0xff]
    %v1936 = vld [vmem:[#allocation10 + $0x368] sm:$0xff]
    %v1937 = vld [vmem:[#allocation10 + $0x370] sm:$0xff]
    %v1938 = vld [vmem:[#allocation10 + $0x378] sm:$0xff]
    %v1939 = vld [vmem:[#allocation10 + $0x380] sm:$0xff]
    %v1940 = vld [vmem:[#allocation10 + $0x388] sm:$0xff]
    %v1941 = vld [vmem:[#allocation10 + $0x390] sm:$0xff]
    %v1942 = vld [vmem:[#allocation10 + $0x398] sm:$0xff]
    %v1943 = vld [vmem:[#allocation10 + $0x3a0] sm:$0xff]
    %v1944 = vld [vmem:[#allocation10 + $0x3a8] sm:$0xff]
    %v1945 = vld [vmem:[#allocation10 + $0x3b0] sm:$0xff]
    %v1946 = vld [vmem:[#allocation10 + $0x3b8] sm:$0xff]
    %v1947 = vld [vmem:[#allocation10 + $0x3c0] sm:$0xff]
    %v1948 = vld [vmem:[#allocation10 + $0x3c8] sm:$0xff]
    %v1949 = vld [vmem:[#allocation10 + $0x3d0] sm:$0xff]
    %v1950 = vld [vmem:[#allocation10 + $0x3d8] sm:$0xff]
    %v1951 = vld [vmem:[#allocation10 + $0x3e0] sm:$0xff]
    %v1952 = vld [vmem:[#allocation10 + $0x3e8] sm:$0xff]
    %v1953 = vld [vmem:[#allocation10 + $0x3f0] sm:$0xff]
    %v1954 = vld [vmem:[#allocation10 + $0x3f8] sm:$0xff]
    %v1955 = vld [vmem:[%s6] sm:$0x1]
    %v1957 = vlaneseq
    %v1958 = vshrl.u32 %v1957, 7
    %v1959 = vsub.s32 0, %v1958
    %v1960 = vrot.slane %v1955, %v1959
    %1962 = vmatprep.subr.mxu0 0.0
    %1963 = vmatpush1.msra.mxu0 %v1842
    %1964 = vmatprep.subr.mxu0 0.0
    %1965 = vmatpush1.msra.mxu0 %v1841
    %1966 = vmatprep.subr.mxu0 0.0
    %1967 = vmatpush1.msra.mxu0 %v1840
    %1968 = vmatprep.subr.mxu0 0.0
    %1969 = vmatpush1.msra.mxu0 %v1839
    %1970 = vmatprep.subr.mxu0 0.0
    %1971 = vmatpush1.msra.mxu0 %v1838
    %1972 = vmatprep.subr.mxu0 0.0
    %1973 = vmatpush1.msra.mxu0 %v1837
    %1974 = vmatprep.subr.mxu0 0.0
    %1975 = vmatpush1.msra.mxu0 %v1836
    %1976 = vmatprep.subr.mxu0 0.0
    %1977 = vmatpush1.msra.mxu0 %v1835
    %1978 = vmatprep.subr.mxu0 0.0
    %1979 = vmatpush1.msra.mxu0 %v1834
    %1980 = vmatprep.subr.mxu0 0.0
    %1981 = vmatpush1.msra.mxu0 %v1833
    %1982 = vmatprep.subr.mxu0 0.0
    %1983 = vmatpush1.msra.mxu0 %v1832
    %1984 = vmatprep.subr.mxu0 0.0
    %1985 = vmatpush1.msra.mxu0 %v1831
    %1986 = vmatprep.subr.mxu0 0.0
    %1987 = vmatpush1.msra.mxu0 %v1830
    %1988 = vmatprep.subr.mxu0 0.0
    %1989 = vmatpush1.msra.mxu0 %v1829
    %1990 = vmatprep.subr.mxu0 0.0
    %1991 = vmatpush1.msra.mxu0 %v1828
    %1992 = vmatprep.subr.mxu0 0.0
    %1993 = vmatpush1.msra.mxu0 %v1827
    %1994 = vmatprep.subr.mxu0 0.0
    %1995 = vmatpush2.msra.mxu0 %v1858
    %1996 = vmatprep.subr.mxu0 0.0
    %1997 = vmatpush2.msra.mxu0 %v1857
    %1998 = vmatprep.subr.mxu0 0.0
    %1999 = vmatpush2.msra.mxu0 %v1856
    %2000 = vmatprep.subr.mxu0 0.0
    %2001 = vmatpush2.msra.mxu0 %v1855
    %2002 = vmatprep.subr.mxu0 0.0
    %2003 = vmatpush2.msra.mxu0 %v1854
    %2004 = vmatprep.subr.mxu0 0.0
    %2005 = vmatpush2.msra.mxu0 %v1853
    %2006 = vmatprep.subr.mxu0 0.0
    %2007 = vmatpush2.msra.mxu0 %v1852
    %2008 = vmatprep.subr.mxu0 0.0
    %2009 = vmatpush2.msra.mxu0 %v1851
    %2010 = vmatprep.subr.mxu0 0.0
    %2011 = vmatpush2.msra.mxu0 %v1850
    %2012 = vmatprep.subr.mxu0 0.0
    %2013 = vmatpush2.msra.mxu0 %v1849
    %2014 = vmatprep.subr.mxu0 0.0
    %2015 = vmatpush2.msra.mxu0 %v1848
    %2016 = vmatprep.subr.mxu0 0.0
    %2017 = vmatpush2.msra.mxu0 %v1847
    %2018 = vmatprep.subr.mxu0 0.0
    %2019 = vmatpush2.msra.mxu0 %v1846
    %2020 = vmatprep.subr.mxu0 0.0
    %2021 = vmatpush2.msra.mxu0 %v1845
    %2022 = vmatprep.subr.mxu0 0.0
    %2023 = vmatpush2.msra.mxu0 %v1844
    %2024 = vmatprep.subr.mxu0 0.0
    %2025 = vmatpush2.msra.mxu0 %v1843
    %2026 = vmatprep.mubr.f32.mxu0 %v1820
    %2027 = vmatmul.mubr.f32.gmra.mxu0 %v1819
    %v2028 = vpop.f32.mrf.mxu0
    %v2029 = vadd.f32 %v1960, %v2028
    %v2030 = vpop.f32.mrf.mxu0
    %2031 = vdwg.mxu0
    %2032 = vmatprep.subr.mxu0 0.0
    %2033 = vmatpush1.msra.mxu0 %v1874
    %2034 = vmatprep.subr.mxu0 0.0
    %2035 = vmatpush1.msra.mxu0 %v1873
    %2036 = vmatprep.subr.mxu0 0.0
    %2037 = vmatpush1.msra.mxu0 %v1872
    %2038 = vmatprep.subr.mxu0 0.0
    %2039 = vmatpush1.msra.mxu0 %v1871
    %2040 = vmatprep.subr.mxu0 0.0
    %2041 = vmatpush1.msra.mxu0 %v1870
    %2042 = vmatprep.subr.mxu0 0.0
    %2043 = vmatpush1.msra.mxu0 %v1869
    %2044 = vmatprep.subr.mxu0 0.0
    %2045 = vmatpush1.msra.mxu0 %v1868
    %2046 = vmatprep.subr.mxu0 0.0
    %2047 = vmatpush1.msra.mxu0 %v1867
    %2048 = vmatprep.subr.mxu0 0.0
    %2049 = vmatpush1.msra.mxu0 %v1866
    %2050 = vmatprep.subr.mxu0 0.0
    %2051 = vmatpush1.msra.mxu0 %v1865
    %2052 = vmatprep.subr.mxu0 0.0
    %2053 = vmatpush1.msra.mxu0 %v1864
    %2054 = vmatprep.subr.mxu0 0.0
    %2055 = vmatpush1.msra.mxu0 %v1863
    %2056 = vmatprep.subr.mxu0 0.0
    %2057 = vmatpush1.msra.mxu0 %v1862
    %2058 = vmatprep.subr.mxu0 0.0
    %2059 = vmatpush1.msra.mxu0 %v1861
    %2060 = vmatprep.subr.mxu0 0.0
    %2061 = vmatpush1.msra.mxu0 %v1860
    %2062 = vmatprep.subr.mxu0 0.0
    %2063 = vmatpush1.msra.mxu0 %v1859
    %2064 = vmatprep.subr.mxu0 0.0
    %2065 = vmatpush2.msra.mxu0 %v1890
    %2066 = vmatprep.subr.mxu0 0.0
    %2067 = vmatpush2.msra.mxu0 %v1889
    %2068 = vmatprep.subr.mxu0 0.0
    %2069 = vmatpush2.msra.mxu0 %v1888
    %2070 = vmatprep.subr.mxu0 0.0
    %2071 = vmatpush2.msra.mxu0 %v1887
    %2072 = vmatprep.subr.mxu0 0.0
    %2073 = vmatpush2.msra.mxu0 %v1886
    %2074 = vmatprep.subr.mxu0 0.0
    %2075 = vmatpush2.msra.mxu0 %v1885
    %2076 = vmatprep.subr.mxu0 0.0
    %2077 = vmatpush2.msra.mxu0 %v1884
    %2078 = vmatprep.subr.mxu0 0.0
    %2079 = vmatpush2.msra.mxu0 %v1883
    %2080 = vmatprep.subr.mxu0 0.0
    %2081 = vmatpush2.msra.mxu0 %v1882
    %2082 = vmatprep.subr.mxu0 0.0
    %2083 = vmatpush2.msra.mxu0 %v1881
    %2084 = vmatprep.subr.mxu0 0.0
    %2085 = vmatpush2.msra.mxu0 %v1880
    %2086 = vmatprep.subr.mxu0 0.0
    %2087 = vmatpush2.msra.mxu0 %v1879
    %2088 = vmatprep.subr.mxu0 0.0
    %2089 = vmatpush2.msra.mxu0 %v1878
    %2090 = vmatprep.subr.mxu0 0.0
    %2091 = vmatpush2.msra.mxu0 %v1877
    %2092 = vmatprep.subr.mxu0 0.0
    %2093 = vmatpush2.msra.mxu0 %v1876
    %2094 = vmatprep.subr.mxu0 0.0
    %2095 = vmatpush2.msra.mxu0 %v1875
    %2096 = vmatprep.mubr.f32.mxu0 %v1822
    %2097 = vmatmul.mubr.f32.gmra.mxu0 %v1821
    %v2098 = vpop.f32.mrf.mxu0
    %v2099 = vadd.f32 %v2029, %v2098
    %v2100 = vpop.f32.mrf.mxu0
    %2101 = vdwg.mxu0
    %2102 = vmatprep.subr.mxu0 0.0
    %2103 = vmatpush1.msra.mxu0 %v1906
    %2104 = vmatprep.subr.mxu0 0.0
    %2105 = vmatpush1.msra.mxu0 %v1905
    %2106 = vmatprep.subr.mxu0 0.0
    %2107 = vmatpush1.msra.mxu0 %v1904
    %2108 = vmatprep.subr.mxu0 0.0
    %2109 = vmatpush1.msra.mxu0 %v1903
    %2110 = vmatprep.subr.mxu0 0.0
    %2111 = vmatpush1.msra.mxu0 %v1902
    %2112 = vmatprep.subr.mxu0 0.0
    %2113 = vmatpush1.msra.mxu0 %v1901
    %2114 = vmatprep.subr.mxu0 0.0
    %2115 = vmatpush1.msra.mxu0 %v1900
    %2116 = vmatprep.subr.mxu0 0.0
    %2117 = vmatpush1.msra.mxu0 %v1899
    %2118 = vmatprep.subr.mxu0 0.0
    %2119 = vmatpush1.msra.mxu0 %v1898
    %2120 = vmatprep.subr.mxu0 0.0
    %2121 = vmatpush1.msra.mxu0 %v1897
    %2122 = vmatprep.subr.mxu0 0.0
    %2123 = vmatpush1.msra.mxu0 %v1896
    %2124 = vmatprep.subr.mxu0 0.0
    %2125 = vmatpush1.msra.mxu0 %v1895
    %2126 = vmatprep.subr.mxu0 0.0
    %2127 = vmatpush1.msra.mxu0 %v1894
    %2128 = vmatprep.subr.mxu0 0.0
    %2129 = vmatpush1.msra.mxu0 %v1893
    %2130 = vmatprep.subr.mxu0 0.0
    %2131 = vmatpush1.msra.mxu0 %v1892
    %2132 = vmatprep.subr.mxu0 0.0
    %2133 = vmatpush1.msra.mxu0 %v1891
    %2134 = vmatprep.subr.mxu0 0.0
    %2135 = vmatpush2.msra.mxu0 %v1922
    %2136 = vmatprep.subr.mxu0 0.0
    %2137 = vmatpush2.msra.mxu0 %v1921
    %2138 = vmatprep.subr.mxu0 0.0
    %2139 = vmatpush2.msra.mxu0 %v1920
    %2140 = vmatprep.subr.mxu0 0.0
    %2141 = vmatpush2.msra.mxu0 %v1919
    %2142 = vmatprep.subr.mxu0 0.0
    %2143 = vmatpush2.msra.mxu0 %v1918
    %2144 = vmatprep.subr.mxu0 0.0
    %2145 = vmatpush2.msra.mxu0 %v1917
    %2146 = vmatprep.subr.mxu0 0.0
    %2147 = vmatpush2.msra.mxu0 %v1916
    %2148 = vmatprep.subr.mxu0 0.0
    %2149 = vmatpush2.msra.mxu0 %v1915
    %2150 = vmatprep.subr.mxu0 0.0
    %2151 = vmatpush2.msra.mxu0 %v1914
    %2152 = vmatprep.subr.mxu0 0.0
    %2153 = vmatpush2.msra.mxu0 %v1913
    %2154 = vmatprep.subr.mxu0 0.0
    %2155 = vmatpush2.msra.mxu0 %v1912
    %2156 = vmatprep.subr.mxu0 0.0
    %2157 = vmatpush2.msra.mxu0 %v1911
    %2158 = vmatprep.subr.mxu0 0.0
    %2159 = vmatpush2.msra.mxu0 %v1910
    %2160 = vmatprep.subr.mxu0 0.0
    %2161 = vmatpush2.msra.mxu0 %v1909
    %2162 = vmatprep.subr.mxu0 0.0
    %2163 = vmatpush2.msra.mxu0 %v1908
    %2164 = vmatprep.subr.mxu0 0.0
    %2165 = vmatpush2.msra.mxu0 %v1907
    %2166 = vmatprep.mubr.f32.mxu0 %v1824
    %2167 = vmatmul.mubr.f32.gmra.mxu0 %v1823
    %v2168 = vpop.f32.mrf.mxu0
    %v2169 = vadd.f32 %v2099, %v2168
    %v2170 = vpop.f32.mrf.mxu0
    %2171 = vdwg.mxu0
    %2172 = vmatprep.subr.mxu0 0.0
    %2173 = vmatpush1.msra.mxu0 %v1938
    %2174 = vmatprep.subr.mxu0 0.0
    %2175 = vmatpush1.msra.mxu0 %v1937
    %2176 = vmatprep.subr.mxu0 0.0
    %2177 = vmatpush1.msra.mxu0 %v1936
    %2178 = vmatprep.subr.mxu0 0.0
    %2179 = vmatpush1.msra.mxu0 %v1935
    %2180 = vmatprep.subr.mxu0 0.0
    %2181 = vmatpush1.msra.mxu0 %v1934
    %2182 = vmatprep.subr.mxu0 0.0
    %2183 = vmatpush1.msra.mxu0 %v1933
    %2184 = vmatprep.subr.mxu0 0.0
    %2185 = vmatpush1.msra.mxu0 %v1932
    %2186 = vmatprep.subr.mxu0 0.0
    %2187 = vmatpush1.msra.mxu0 %v1931
    %2188 = vmatprep.subr.mxu0 0.0
    %2189 = vmatpush1.msra.mxu0 %v1930
    %2190 = vmatprep.subr.mxu0 0.0
    %2191 = vmatpush1.msra.mxu0 %v1929
    %2192 = vmatprep.subr.mxu0 0.0
    %2193 = vmatpush1.msra.mxu0 %v1928
    %2194 = vmatprep.subr.mxu0 0.0
    %2195 = vmatpush1.msra.mxu0 %v1927
    %2196 = vmatprep.subr.mxu0 0.0
    %2197 = vmatpush1.msra.mxu0 %v1926
    %2198 = vmatprep.subr.mxu0 0.0
    %2199 = vmatpush1.msra.mxu0 %v1925
    %2200 = vmatprep.subr.mxu0 0.0
    %2201 = vmatpush1.msra.mxu0 %v1924
    %2202 = vmatprep.subr.mxu0 0.0
    %2203 = vmatpush1.msra.mxu0 %v1923
    %2204 = vmatprep.subr.mxu0 0.0
    %2205 = vmatpush2.msra.mxu0 %v1954
    %2206 = vmatprep.subr.mxu0 0.0
    %2207 = vmatpush2.msra.mxu0 %v1953
    %2208 = vmatprep.subr.mxu0 0.0
    %2209 = vmatpush2.msra.mxu0 %v1952
    %2210 = vmatprep.subr.mxu0 0.0
    %2211 = vmatpush2.msra.mxu0 %v1951
    %2212 = vmatprep.subr.mxu0 0.0
    %2213 = vmatpush2.msra.mxu0 %v1950
    %2214 = vmatprep.subr.mxu0 0.0
    %2215 = vmatpush2.msra.mxu0 %v1949
    %2216 = vmatprep.subr.mxu0 0.0
    %2217 = vmatpush2.msra.mxu0 %v1948
    %2218 = vmatprep.subr.mxu0 0.0
    %2219 = vmatpush2.msra.mxu0 %v1947
    %2220 = vmatprep.subr.mxu0 0.0
    %2221 = vmatpush2.msra.mxu0 %v1946
    %2222 = vmatprep.subr.mxu0 0.0
    %2223 = vmatpush2.msra.mxu0 %v1945
    %2224 = vmatprep.subr.mxu0 0.0
    %2225 = vmatpush2.msra.mxu0 %v1944
    %2226 = vmatprep.subr.mxu0 0.0
    %2227 = vmatpush2.msra.mxu0 %v1943
    %2228 = vmatprep.subr.mxu0 0.0
    %2229 = vmatpush2.msra.mxu0 %v1942
    %2230 = vmatprep.subr.mxu0 0.0
    %2231 = vmatpush2.msra.mxu0 %v1941
    %2232 = vmatprep.subr.mxu0 0.0
    %2233 = vmatpush2.msra.mxu0 %v1940
    %2234 = vmatprep.subr.mxu0 0.0
    %2235 = vmatpush2.msra.mxu0 %v1939
    %2236 = vmatprep.mubr.f32.mxu0 %v1826
    %2237 = vmatmul.mubr.f32.gmra.mxu0 %v1825
    %v2238 = vpop.f32.mrf.mxu0
    %v2239 = vadd.f32 %v2169, %v2238
    %v2240 = vpop.f32.mrf.mxu0
    %2241 = vdwg.mxu0
    %2242 = vst [vmem:[#allocation12] sm:$0xff] %v2239
    // Predicated region
    $region46: #{tpu_custom_call.1} parent=1 // pred_check
      _
    $region47: #{tpu_custom_call.1} parent=1 // pred_check_branch
      %2244 = sbr.rel (0) target = $region49
    $region48: #{tpu_custom_call.1} parent=1 // pred_region
      %s2246 = ssub.s32 128, 128
      %2247 = vsyncadd [#allocation6], %s2246
      %s2249 = sshll.u32 [#allocation12], 4
      %s2250 = int_to_ptr.vmem [resolvable:$true] %s2249
      %2252 = dma.vmem_to_hbm [thread:$0]  %s2250, 128, %s7, [#allocation6]
    $region49: #{tpu_custom_call.1} parent=1 // pred_fallthru
      _
    // Predicated region
    $region50: #{tpu_custom_call.1} parent=1 // pred_check
      _
    $region51: #{tpu_custom_call.1} parent=1 // pred_check_branch
      %2254 = sbr.rel (0) target = $region53
    $region52: #{tpu_custom_call.1} parent=1 // pred_region
      %2255 = dma.done [#allocation6], 128
    $region53: #{tpu_custom_call.1} parent=1 // pred_fallthru
      _
    %2256 = vsyncpa [#allocation5], 1
    %2257 = vsyncpa [#allocation8], 1
    %2258 = vsyncpa [#allocation11], 1
    %2259 = vsyncpa [#allocation6], 1

</llo_original>
